<compile_context>
chip_gen: v7x
topology: tpu7x:2x2x1
jax: 0.10.0
libtpu: 0.0.40
codegen_flags: <defaults>
</compile_context>

<pallas_src>
import functools

import numpy as np
import jax
import jax.numpy as jnp
from jax.experimental import pallas as pl
from jax.experimental.pallas import tpu as pltpu


def _round_up(x, m):
    return ((x + m - 1) // m) * m


def _branch_mlp_rowmajor(h, w_in, b_in, w_hid, b_hid, w_out, b_out):
    """5-layer MLP, batch-major. h: (nb, in); W: (in, out); b: (1, out)."""
    h = jnp.tanh(jnp.dot(h, w_in, preferred_element_type=jnp.float32) + b_in)
    for l in range(3):
        h = jnp.tanh(jnp.dot(h, w_hid[l], preferred_element_type=jnp.float32) + b_hid[l])
    return jnp.dot(h, w_out, preferred_element_type=jnp.float32) + b_out


def _trunk_mlp_featmajor(h, w_in, b_in, w_hid, b_hid, w_out, b_out):
    """5-layer MLP, feature-major (coords on lanes). h: (in, nc); W: (out, in); b: (out, 1)."""
    # First layer has K = coord_dim (2..3): too shallow for the MXU -> unrolled
    # VPU broadcast multiply-adds (runs once per coord tile, avoids a padded
    # matmul + operand relayout).
    coord_dim = h.shape[0]
    z = w_in[:, 0:1] * h[0:1, :]
    for d in range(1, coord_dim):
        z = z + w_in[:, d:d + 1] * h[d:d + 1, :]
    z = jnp.tanh(z + b_in)
    for l in range(3):
        z = jnp.tanh(jnp.dot(w_hid[l], z, preferred_element_type=jnp.float32) + b_hid[l])
    return jnp.dot(w_out, z, preferred_element_type=jnp.float32) + b_out


def _deeponet_kernel(noise_ref, coords_ref,
                     bw_in, bb_in, bw_hid, bb_hid, bw_out, bb_out,
                     tw_in, tb_in, tw_hid, tb_hid, tw_out, tb_out,
                     bias0_ref,
                     o_ref,
                     trunk_acc,
                     *, contract_in_bf16):
    # Inner (noise-tile) index.  The trunk cache below is only correct because
    # this axis is the innermost grid axis and is marked 'arbitrary'.
    i = pl.program_id(1)

    # The coordinate tile only changes when the outer grid index advances, so
    # compute the trunk MLP once per coord tile and keep its (p, block_bc)
    # output resident in VMEM scratch across the inner noise loop.
    @pl.when(i == 0)
    def _():
        trunk_acc[...] = jnp.tanh(
            _trunk_mlp_featmajor(coords_ref[...],
                                 tw_in[...], tb_in[...], tw_hid[...], tb_hid[...],
                                 tw_out[...], tb_out[...]))

    # Branch MLP for the current noise tile (tiny compared with trunk/output).
    out_b = _branch_mlp_rowmajor(noise_ref[...],
                                 bw_in[...], bb_in[...], bw_hid[...], bb_hid[...],
                                 bw_out[...], bb_out[...])          # (block_bn, p)

    # DeepONet contraction over p; output tile is lane-dense (block_bc on lanes).
    trunk = trunk_acc[...]
    if contract_in_bf16:
        # Opt-in low-precision path (paired with the bf16 output store): bf16
        # MXU inputs + f32 accumulation remove the f32 multi-pass / K-padding
        # waste of the tiny-K contraction.  Quantization is swamped by the
        # bf16 output store anyway.
        out_b = out_b.astype(jnp.bfloat16)
        trunk = trunk.astype(jnp.bfloat16)
    g = jnp.dot(out_b, trunk, preferred_element_type=jnp.float32)
    o_ref[...] = (g + bias0_ref[0]).astype(o_ref.dtype)


@functools.partial(jax.jit, static_argnames=("block_bn", "block_bc", "out_dtype"))
def deeponet_forward(noise, coords, branch_params, trunk_params, bias0,
                     *, block_bn=None, block_bc=None, out_dtype=None):
    """noise: (Bn, noise_feature) f32; coords: (Bc, coords_features) f32.

    branch_params / trunk_params: list of 5 (W, b) in PyTorch layout
    (W: (out, in), b: (out, 1)).  bias0: (1,) f32.
    out_dtype: output storage dtype; jnp.bfloat16 halves HBM writeback (the
    kernel is output-write bound) at ~0.4% relative error (opt-in).
    Returns the flattened (Bn * Bc,) prediction, matching DeepONet.forward.
    """
    Bn, noise_dim = noise.shape
    Bc, coord_dim = coords.shape
    p = branch_params[-1][0].shape[0]
    if out_dtype is None:
        out_dtype = noise.dtype

    # --- tile selection (large tiles amortize the ~0.35 us per-grid-step) ----
    if block_bn is None:
        block_bn = Bn if Bn <= 512 else 512              # full dim or mult of 8
    if block_bc is None:
        if Bc <= 1024:
            block_bc = Bc                                 # one contiguous slab per row
        else:
            # >=2 coord tiles so the 'parallel' axis feeds both v7x TensorCores,
            # capped at 2048 lanes so the double-buffered output tile stays well
            # inside v7x's 64 MiB physical VMEM.  Each written chunk stays >=2KB.
            block_bc = min(2048, _round_up((Bc + 1) // 2, 128))

    grid = (pl.cdiv(Bc, block_bc), pl.cdiv(Bn, block_bn))  # (coord tiles, noise tiles)

    # Trunk inputs feature-major so coordinates sit on the lane axis.
    coords_t = coords.T                                    # (coord_dim, Bc)

    def pack_rowmajor(params):                             # branch: (in, out) layout
        (w1, b1), (w2, b2), (w3, b3), (w4, b4), (w5, b5) = params
        return (w1.T, b1.T,
                jnp.stack([w2.T, w3.T, w4.T]), jnp.stack([b2.T, b3.T, b4.T]),
                w5.T, b5.T)

    def pack_featmajor(params):                            # trunk: (out, in) layout
        (w1, b1), (w2, b2), (w3, b3), (w4, b4), (w5, b5) = params
        return (w1, b1,
                jnp.stack([w2, w3, w4]), jnp.stack([b2, b3, b4]),
                w5, b5)

    bp = pack_rowmajor(branch_params)
    tp = pack_featmajor(trunk_params)

    def full2d(shape):
        return pl.BlockSpec(shape, lambda j, i: (0, 0))

    def full3d(shape):
        return pl.BlockSpec(shape, lambda j, i: (0, 0, 0))

    def param_specs(packed):
        w_in, b_in, w_hid, b_hid, w_out, b_out = packed
        return [full2d(w_in.shape), full2d(b_in.shape),
                full3d(w_hid.shape), full3d(b_hid.shape),
                full2d(w_out.shape), full2d(b_out.shape)]

    in_specs = (
        [pl.BlockSpec((block_bn, noise_dim), lambda j, i: (i, 0)),
         pl.BlockSpec((coord_dim, block_bc), lambda j, i: (0, j))]
        + param_specs(bp) + param_specs(tp)
        + [pl.BlockSpec(memory_space=pltpu.MemorySpace.SMEM)]   # scalar bias
    )
    out_specs = pl.BlockSpec((block_bn, block_bc), lambda j, i: (i, j))

    # Explicit scoped-VMEM budget: v5e's default scoped limit is only 16 MiB;
    # cap at 64 MiB (v7x physical).  Dominant term: double-buffered output tile.
    out_itemsize = np.dtype(out_dtype).itemsize
    vmem_needed = (2 * block_bn * block_bc * out_itemsize      # output (double buffered)
                   + 2 * block_bn * noise_dim * 4              # noise tile
                   + 2 * coord_dim * block_bc * 4              # coords tile
                   + p * block_bc * 4                          # trunk scratch
                   + 2 * 32 * block_bc * 4                     # trunk hidden activations
                   + 256 * 1024)                               # weights + slack
    vmem_limit = int(min(max(2 * vmem_needed, 32 << 20), 64 << 20))

    use_bf16_contract = np.dtype(out_dtype) == np.dtype(jnp.bfloat16)

    g = pl.pallas_call(
        functools.partial(_deeponet_kernel, contract_in_bf16=use_bf16_contract),
        out_shape=jax.ShapeDtypeStruct((Bn, Bc), out_dtype),
        grid=grid,
        in_specs=in_specs,
        out_specs=out_specs,
        scratch_shapes=[pltpu.VMEM((p, block_bc), jnp.float32)],
        compiler_params=pltpu.CompilerParams(
            # Coord axis 'parallel' (megacore split on v7x); the noise axis MUST
            # stay the innermost 'arbitrary' axis for trunk_acc caching validity.
            dimension_semantics=("parallel", "arbitrary"),
            vmem_limit_bytes=vmem_limit),
    )(noise, coords_t, *bp, *tp, bias0)

    # Row-major flatten reproduces repeat_interleave(branch) * tile(trunk) + bias.
    return g.reshape(Bn * Bc)


def init_mlp_params(key, in_dim, out_dim, width=32):
    """(W, b) pairs in PyTorch nn.Linear layout: W (out, in), b (out, 1)."""
    dims = [(width, in_dim), (width, width), (width, width), (width, width),
            (out_dim, width)]
    params = []
    for fan_out, fan_in in dims:
        key, kw, kb = jax.random.split(key, 3)
        bound = float(fan_in) ** -0.5
        w = jax.random.uniform(kw, (fan_out, fan_in), jnp.float32, -bound, bound)
        b = jax.random.uniform(kb, (fan_out, 1), jnp.float32, -bound, bound)
        params.append((w, b))
    return params


def deeponet_reference(noise, coords, branch_params, trunk_params, bias0):
    """Plain-JAX mirror of the PyTorch DeepONet.forward."""
    def mlp(x, params):
        h = x
        for w, b in params[:-1]:
            h = jnp.tanh(h @ w.T + b[:, 0])
        w, b = params[-1]
        return h @ w.T + b[:, 0]

    out_b = mlp(noise, branch_params)                 # (Bn, p)
    out_t = jnp.tanh(mlp(coords, trunk_params))       # (Bc, p)
    out_b = jnp.repeat(out_b, coords.shape[0], axis=0)       # repeat_interleave
    out_t = jnp.tile(out_t, (noise.shape[0], 1))              # torch.tile
    return jnp.sum(out_b * out_t, axis=1) + bias0[0]


if __name__ == "__main__":
    key = jax.random.PRNGKey(0)
    kn, kc, kb, kt, kn2, kc2 = jax.random.split(key, 6)

    # Small shapes consistent with the module:
    #   noise_feature = #sensors, coords_features = spatial dim d, p = latent dim.
    noise_feature, coords_features, p, width = 16, 2, 8, 32
    n_noise, n_coords = 16, 256

    noise = jax.random.normal(kn, (n_noise, noise_feature), jnp.float32)
    coords = jax.random.uniform(kc, (n_coords, coords_features), jnp.float32)

    branch_params = init_mlp_params(kb, noise_feature, p, width)
    trunk_params = init_mlp_params(kt, coords_features, p, width)
    bias0 = jnp.ones((1,), jnp.float32)   # DeepONet.bias_params = torch.ones(1)

    g_ref = deeponet_reference(noise, coords, branch_params, trunk_params, bias0)

    # 1) Default (auto-tiled), exact f32 path.
    g = jax.block_until_ready(
        deeponet_forward(noise, coords, branch_params, trunk_params, bias0))
    assert g.shape == (n_noise * n_coords,)
    assert jnp.allclose(g, g_ref, atol=1e-4, rtol=1e-4), "f32 default mismatch"

    # 2) Small explicit tiles: exercises a 2x2 grid (trunk cache reused across
    #    the inner noise loop) with exact f32 numerics.
    g_t = jax.block_until_ready(
        deeponet_forward(noise, coords, branch_params, trunk_params, bias0,
                         block_bn=8, block_bc=128))
    assert jnp.allclose(g_t, g_ref, atol=1e-4, rtol=1e-4), "tiled mismatch"

    # 3) Opt-in bf16 output store (halves HBM writeback on this output-bound
    #    kernel); relaxed tolerance because of the bf16 quantization.
    g_bf16 = jax.block_until_ready(
        deeponet_forward(noise, coords, branch_params, trunk_params, bias0,
                         out_dtype=jnp.bfloat16))
    assert jnp.allclose(g_bf16.astype(jnp.float32), g_ref, atol=5e-2, rtol=5e-2), \
        "bf16-output mismatch"

    # 4) Non-aligned shapes -> 2 coord tiles with a partial last tile under the
    #    default tiling heuristic.
    n_noise2, n_coords2 = 24, 1300
    noise2 = jax.random.normal(kn2, (n_noise2, noise_feature), jnp.float32)
    coords2 = jax.random.uniform(kc2, (n_coords2, coords_features), jnp.float32)
    g2 = jax.block_until_ready(
        deeponet_forward(noise2, coords2, branch_params, trunk_params, bias0))
    g2_ref = deeponet_reference(noise2, coords2, branch_params, trunk_params, bias0)
    assert g2.shape == (n_noise2 * n_coords2,)
    assert jnp.allclose(g2, g2_ref, atol=1e-4, rtol=1e-4), "partial-tile mismatch"

    print("KERNEL_OK")
</pallas_src>

<mosaic_0001>
module attributes {stable_mosaic.version = 11 : i64} {
  func.func @_deeponet_kernel(%arg0: i32, %arg1: i32, %arg2: memref<16x16xf32, #tpu.memory_space<vmem>>, %arg3: memref<2x256xf32, #tpu.memory_space<vmem>>, %arg4: memref<16x32xf32, #tpu.memory_space<vmem>>, %arg5: memref<1x32xf32, #tpu.memory_space<vmem>>, %arg6: memref<3x32x32xf32, #tpu.memory_space<vmem>>, %arg7: memref<3x1x32xf32, #tpu.memory_space<vmem>>, %arg8: memref<32x8xf32, #tpu.memory_space<vmem>>, %arg9: memref<1x8xf32, #tpu.memory_space<vmem>>, %arg10: memref<32x2xf32, #tpu.memory_space<vmem>>, %arg11: memref<32x1xf32, #tpu.memory_space<vmem>>, %arg12: memref<3x32x32xf32, #tpu.memory_space<vmem>>, %arg13: memref<3x32x1xf32, #tpu.memory_space<vmem>>, %arg14: memref<8x32xf32, #tpu.memory_space<vmem>>, %arg15: memref<8x1xf32, #tpu.memory_space<vmem>>, %arg16: memref<1xf32, #tpu.memory_space<smem>>, %arg17: memref<16x256xf32, #tpu.memory_space<vmem>>, %arg18: memref<8x256xf32, #tpu.memory_space<vmem>>) attributes {dimension_semantics = [#tpu.dimension_semantics<parallel>, #tpu.dimension_semantics<arbitrary>], iteration_bounds = array<i64: 1, 1>, scalar_prefetch = 0 : i64, scratch_operands = 1 : i64, tpu.core_type = #tpu.core_type<tc>, window_params = [{transform_indices = @transform_0, window_bounds = array<i64: 16, 16>}, {transform_indices = @transform_1, window_bounds = array<i64: 2, 256>}, {pipeline_mode = #tpu.pipeline_mode<synchronous>, transform_indices = @transform_2, window_bounds = array<i64: 16, 32>}, {pipeline_mode = #tpu.pipeline_mode<synchronous>, transform_indices = @transform_3, window_bounds = array<i64: 1, 32>}, {pipeline_mode = #tpu.pipeline_mode<synchronous>, transform_indices = @transform_4, window_bounds = array<i64: 3, 32, 32>}, {pipeline_mode = #tpu.pipeline_mode<synchronous>, transform_indices = @transform_5, window_bounds = array<i64: 3, 1, 32>}, {pipeline_mode = #tpu.pipeline_mode<synchronous>, transform_indices = @transform_6, window_bounds = array<i64: 32, 8>}, {pipeline_mode = #tpu.pipeline_mode<synchronous>, transform_indices = @transform_7, window_bounds = array<i64: 1, 8>}, {pipeline_mode = #tpu.pipeline_mode<synchronous>, transform_indices = @transform_8, window_bounds = array<i64: 32, 2>}, {pipeline_mode = #tpu.pipeline_mode<synchronous>, transform_indices = @transform_9, window_bounds = array<i64: 32, 1>}, {pipeline_mode = #tpu.pipeline_mode<synchronous>, transform_indices = @transform_10, window_bounds = array<i64: 3, 32, 32>}, {pipeline_mode = #tpu.pipeline_mode<synchronous>, transform_indices = @transform_11, window_bounds = array<i64: 3, 32, 1>}, {pipeline_mode = #tpu.pipeline_mode<synchronous>, transform_indices = @transform_12, window_bounds = array<i64: 8, 32>}, {pipeline_mode = #tpu.pipeline_mode<synchronous>, transform_indices = @transform_13, window_bounds = array<i64: 8, 1>}, {transform_indices = @transform_14, window_bounds = array<i64: 1>}, {transform_indices = @transform_15, window_bounds = array<i64: 16, 256>}]} {
    %c0_i32 = arith.constant 0 : i32
    %0 = arith.cmpi eq, %arg1, %c0_i32 : i32
    %1 = arith.extui %0 : i1 to i32
    %c0_i32_0 = arith.constant 0 : i32
    %2 = arith.cmpi ne, %1, %c0_i32_0 : i32
    scf.if %2 {
      %c0_26 = arith.constant 0 : index
      %c0_27 = arith.constant 0 : index
      %47 = vector.load %arg3[%c0_26, %c0_27] : memref<2x256xf32, #tpu.memory_space<vmem>>, vector<2x256xf32>
      %c0_28 = arith.constant 0 : index
      %c0_29 = arith.constant 0 : index
      %48 = vector.load %arg10[%c0_28, %c0_29] : memref<32x2xf32, #tpu.memory_space<vmem>>, vector<32x2xf32>
      %c0_30 = arith.constant 0 : index
      %c0_31 = arith.constant 0 : index
      %49 = vector.load %arg11[%c0_30, %c0_31] : memref<32x1xf32, #tpu.memory_space<vmem>>, vector<32x1xf32>
      %c0_32 = arith.constant 0 : index
      %c0_33 = arith.constant 0 : index
      %c0_34 = arith.constant 0 : index
      %50 = vector.load %arg12[%c0_32, %c0_33, %c0_34] : memref<3x32x32xf32, #tpu.memory_space<vmem>>, vector<3x32x32xf32>
      %c0_35 = arith.constant 0 : index
      %c0_36 = arith.constant 0 : index
      %c0_37 = arith.constant 0 : index
      %51 = vector.load %arg13[%c0_35, %c0_36, %c0_37] : memref<3x32x1xf32, #tpu.memory_space<vmem>>, vector<3x32x1xf32>
      %c0_38 = arith.constant 0 : index
      %c0_39 = arith.constant 0 : index
      %52 = vector.load %arg14[%c0_38, %c0_39] : memref<8x32xf32, #tpu.memory_space<vmem>>, vector<8x32xf32>
      %c0_40 = arith.constant 0 : index
      %c0_41 = arith.constant 0 : index
      %53 = vector.load %arg15[%c0_40, %c0_41] : memref<8x1xf32, #tpu.memory_space<vmem>>, vector<8x1xf32>
      %54 = vector.extract_strided_slice %48 {offsets = [0, 0], sizes = [32, 1], strides = [1, 1]} : vector<32x2xf32> to vector<32x1xf32>
      %55 = vector.extract_strided_slice %47 {offsets = [0, 0], sizes = [1, 256], strides = [1, 1]} : vector<2x256xf32> to vector<1x256xf32>
      %56 = vector.broadcast %54 : vector<32x1xf32> to vector<32x256xf32>
      %57 = vector.broadcast %55 : vector<1x256xf32> to vector<32x256xf32>
      %58 = arith.mulf %56, %57 : vector<32x256xf32>
      %59 = vector.extract_strided_slice %48 {offsets = [0, 1], sizes = [32, 1], strides = [1, 1]} : vector<32x2xf32> to vector<32x1xf32>
      %60 = vector.extract_strided_slice %47 {offsets = [1, 0], sizes = [1, 256], strides = [1, 1]} : vector<2x256xf32> to vector<1x256xf32>
      %61 = vector.broadcast %59 : vector<32x1xf32> to vector<32x256xf32>
      %62 = vector.broadcast %60 : vector<1x256xf32> to vector<32x256xf32>
      %63 = arith.mulf %61, %62 : vector<32x256xf32>
      %64 = arith.addf %58, %63 : vector<32x256xf32>
      %65 = vector.broadcast %49 : vector<32x1xf32> to vector<32x256xf32>
      %66 = arith.addf %64, %65 : vector<32x256xf32>
      %67 = math.tanh %66 : vector<32x256xf32>
      %68 = vector.extract_strided_slice %50 {offsets = [0, 0, 0], sizes = [1, 32, 32], strides = [1, 1, 1]} : vector<3x32x32xf32> to vector<1x32x32xf32>
      %69 = vector.shape_cast %68 : vector<1x32x32xf32> to vector<32x32xf32>
      %cst_42 = arith.constant dense<0.000000e+00> : vector<32x256xf32>
      %70 = tpu.matmul %69, %67, %cst_42 {dimension_numbers = #tpu.dot_dimension_numbers<[1], [0], [0], [1], [0, 0, 1, 1], [], []>} : vector<32x32xf32>, vector<32x256xf32>, vector<32x256xf32> -> vector<32x256xf32>
      %71 = vector.extract_strided_slice %51 {offsets = [0, 0, 0], sizes = [1, 32, 1], strides = [1, 1, 1]} : vector<3x32x1xf32> to vector<1x32x1xf32>
      %72 = vector.shape_cast %71 : vector<1x32x1xf32> to vector<32x1xf32>
      %73 = vector.broadcast %72 : vector<32x1xf32> to vector<32x256xf32>
      %74 = arith.addf %70, %73 : vector<32x256xf32>
      %75 = math.tanh %74 : vector<32x256xf32>
      %76 = vector.extract_strided_slice %50 {offsets = [1, 0, 0], sizes = [1, 32, 32], strides = [1, 1, 1]} : vector<3x32x32xf32> to vector<1x32x32xf32>
      %77 = vector.shape_cast %76 : vector<1x32x32xf32> to vector<32x32xf32>
      %cst_43 = arith.constant dense<0.000000e+00> : vector<32x256xf32>
      %78 = tpu.matmul %77, %75, %cst_43 {dimension_numbers = #tpu.dot_dimension_numbers<[1], [0], [0], [1], [0, 0, 1, 1], [], []>} : vector<32x32xf32>, vector<32x256xf32>, vector<32x256xf32> -> vector<32x256xf32>
      %79 = vector.extract_strided_slice %51 {offsets = [1, 0, 0], sizes = [1, 32, 1], strides = [1, 1, 1]} : vector<3x32x1xf32> to vector<1x32x1xf32>
      %80 = vector.shape_cast %79 : vector<1x32x1xf32> to vector<32x1xf32>
      %81 = vector.broadcast %80 : vector<32x1xf32> to vector<32x256xf32>
      %82 = arith.addf %78, %81 : vector<32x256xf32>
      %83 = math.tanh %82 : vector<32x256xf32>
      %84 = vector.extract_strided_slice %50 {offsets = [2, 0, 0], sizes = [1, 32, 32], strides = [1, 1, 1]} : vector<3x32x32xf32> to vector<1x32x32xf32>
      %85 = vector.shape_cast %84 : vector<1x32x32xf32> to vector<32x32xf32>
      %cst_44 = arith.constant dense<0.000000e+00> : vector<32x256xf32>
      %86 = tpu.matmul %85, %83, %cst_44 {dimension_numbers = #tpu.dot_dimension_numbers<[1], [0], [0], [1], [0, 0, 1, 1], [], []>} : vector<32x32xf32>, vector<32x256xf32>, vector<32x256xf32> -> vector<32x256xf32>
      %87 = vector.extract_strided_slice %51 {offsets = [2, 0, 0], sizes = [1, 32, 1], strides = [1, 1, 1]} : vector<3x32x1xf32> to vector<1x32x1xf32>
      %88 = vector.shape_cast %87 : vector<1x32x1xf32> to vector<32x1xf32>
      %89 = vector.broadcast %88 : vector<32x1xf32> to vector<32x256xf32>
      %90 = arith.addf %86, %89 : vector<32x256xf32>
      %91 = math.tanh %90 : vector<32x256xf32>
      %cst_45 = arith.constant dense<0.000000e+00> : vector<8x256xf32>
      %92 = tpu.matmul %52, %91, %cst_45 {dimension_numbers = #tpu.dot_dimension_numbers<[1], [0], [0], [1], [0, 0, 1, 1], [], []>} : vector<8x32xf32>, vector<32x256xf32>, vector<8x256xf32> -> vector<8x256xf32>
      %93 = vector.broadcast %53 : vector<8x1xf32> to vector<8x256xf32>
      %94 = arith.addf %92, %93 : vector<8x256xf32>
      %95 = math.tanh %94 : vector<8x256xf32>
      %c0_46 = arith.constant 0 : index
      %c0_47 = arith.constant 0 : index
      %96 = vector.load %arg18[%c0_46, %c0_47] : memref<8x256xf32, #tpu.memory_space<vmem>>, vector<8x256xf32>
      tpu.vector_store %arg18[%c0_46, %c0_47], %95 {strides = array<i32>} : memref<8x256xf32, #tpu.memory_space<vmem>>, vector<8x256xf32>,
    } else {
    }
    %c0 = arith.constant 0 : index
    %c0_1 = arith.constant 0 : index
    %3 = vector.load %arg2[%c0, %c0_1] : memref<16x16xf32, #tpu.memory_space<vmem>>, vector<16x16xf32>
    %c0_2 = arith.constant 0 : index
    %c0_3 = arith.constant 0 : index
    %4 = vector.load %arg4[%c0_2, %c0_3] : memref<16x32xf32, #tpu.memory_space<vmem>>, vector<16x32xf32>
    %c0_4 = arith.constant 0 : index
    %c0_5 = arith.constant 0 : index
    %5 = vector.load %arg5[%c0_4, %c0_5] : memref<1x32xf32, #tpu.memory_space<vmem>>, vector<1x32xf32>
    %c0_6 = arith.constant 0 : index
    %c0_7 = arith.constant 0 : index
    %c0_8 = arith.constant 0 : index
    %6 = vector.load %arg6[%c0_6, %c0_7, %c0_8] : memref<3x32x32xf32, #tpu.memory_space<vmem>>, vector<3x32x32xf32>
    %c0_9 = arith.constant 0 : index
    %c0_10 = arith.constant 0 : index
    %c0_11 = arith.constant 0 : index
    %7 = vector.load %arg7[%c0_9, %c0_10, %c0_11] : memref<3x1x32xf32, #tpu.memory_space<vmem>>, vector<3x1x32xf32>
    %c0_12 = arith.constant 0 : index
    %c0_13 = arith.constant 0 : index
    %8 = vector.load %arg8[%c0_12, %c0_13] : memref<32x8xf32, #tpu.memory_space<vmem>>, vector<32x8xf32>
    %c0_14 = arith.constant 0 : index
    %c0_15 = arith.constant 0 : index
    %9 = vector.load %arg9[%c0_14, %c0_15] : memref<1x8xf32, #tpu.memory_space<vmem>>, vector<1x8xf32>
    %cst = arith.constant dense<0.000000e+00> : vector<16x32xf32>
    %10 = tpu.matmul %3, %4, %cst {dimension_numbers = #tpu.dot_dimension_numbers<[1], [0], [0], [1], [0, 0, 1, 1], [], []>} : vector<16x16xf32>, vector<16x32xf32>, vector<16x32xf32> -> vector<16x32xf32>
    %11 = vector.broadcast %5 : vector<1x32xf32> to vector<16x32xf32>
    %12 = arith.addf %10, %11 : vector<16x32xf32>
    %13 = math.tanh %12 : vector<16x32xf32>
    %14 = vector.extract_strided_slice %6 {offsets = [0, 0, 0], sizes = [1, 32, 32], strides = [1, 1, 1]} : vector<3x32x32xf32> to vector<1x32x32xf32>
    %15 = vector.shape_cast %14 : vector<1x32x32xf32> to vector<32x32xf32>
    %cst_16 = arith.constant dense<0.000000e+00> : vector<16x32xf32>
    %16 = tpu.matmul %13, %15, %cst_16 {dimension_numbers = #tpu.dot_dimension_numbers<[1], [0], [0], [1], [0, 0, 1, 1], [], []>} : vector<16x32xf32>, vector<32x32xf32>, vector<16x32xf32> -> vector<16x32xf32>
    %17 = vector.extract_strided_slice %7 {offsets = [0, 0, 0], sizes = [1, 1, 32], strides = [1, 1, 1]} : vector<3x1x32xf32> to vector<1x1x32xf32>
    %18 = vector.shape_cast %17 : vector<1x1x32xf32> to vector<1x32xf32>
    %19 = vector.broadcast %18 : vector<1x32xf32> to vector<16x32xf32>
    %20 = arith.addf %16, %19 : vector<16x32xf32>
    %21 = math.tanh %20 : vector<16x32xf32>
    %22 = vector.extract_strided_slice %6 {offsets = [1, 0, 0], sizes = [1, 32, 32], strides = [1, 1, 1]} : vector<3x32x32xf32> to vector<1x32x32xf32>
    %23 = vector.shape_cast %22 : vector<1x32x32xf32> to vector<32x32xf32>
    %cst_17 = arith.constant dense<0.000000e+00> : vector<16x32xf32>
    %24 = tpu.matmul %21, %23, %cst_17 {dimension_numbers = #tpu.dot_dimension_numbers<[1], [0], [0], [1], [0, 0, 1, 1], [], []>} : vector<16x32xf32>, vector<32x32xf32>, vector<16x32xf32> -> vector<16x32xf32>
    %25 = vector.extract_strided_slice %7 {offsets = [1, 0, 0], sizes = [1, 1, 32], strides = [1, 1, 1]} : vector<3x1x32xf32> to vector<1x1x32xf32>
    %26 = vector.shape_cast %25 : vector<1x1x32xf32> to vector<1x32xf32>
    %27 = vector.broadcast %26 : vector<1x32xf32> to vector<16x32xf32>
    %28 = arith.addf %24, %27 : vector<16x32xf32>
    %29 = math.tanh %28 : vector<16x32xf32>
    %30 = vector.extract_strided_slice %6 {offsets = [2, 0, 0], sizes = [1, 32, 32], strides = [1, 1, 1]} : vector<3x32x32xf32> to vector<1x32x32xf32>
    %31 = vector.shape_cast %30 : vector<1x32x32xf32> to vector<32x32xf32>
    %cst_18 = arith.constant dense<0.000000e+00> : vector<16x32xf32>
    %32 = tpu.matmul %29, %31, %cst_18 {dimension_numbers = #tpu.dot_dimension_numbers<[1], [0], [0], [1], [0, 0, 1, 1], [], []>} : vector<16x32xf32>, vector<32x32xf32>, vector<16x32xf32> -> vector<16x32xf32>
    %33 = vector.extract_strided_slice %7 {offsets = [2, 0, 0], sizes = [1, 1, 32], strides = [1, 1, 1]} : vector<3x1x32xf32> to vector<1x1x32xf32>
    %34 = vector.shape_cast %33 : vector<1x1x32xf32> to vector<1x32xf32>
    %35 = vector.broadcast %34 : vector<1x32xf32> to vector<16x32xf32>
    %36 = arith.addf %32, %35 : vector<16x32xf32>
    %37 = math.tanh %36 : vector<16x32xf32>
    %cst_19 = arith.constant dense<0.000000e+00> : vector<16x8xf32>
    %38 = tpu.matmul %37, %8, %cst_19 {dimension_numbers = #tpu.dot_dimension_numbers<[1], [0], [0], [1], [0, 0, 1, 1], [], []>} : vector<16x32xf32>, vector<32x8xf32>, vector<16x8xf32> -> vector<16x8xf32>
    %39 = vector.broadcast %9 : vector<1x8xf32> to vector<16x8xf32>
    %40 = arith.addf %38, %39 : vector<16x8xf32>
    %c0_20 = arith.constant 0 : index
    %c0_21 = arith.constant 0 : index
    %41 = vector.load %arg18[%c0_20, %c0_21] : memref<8x256xf32, #tpu.memory_space<vmem>>, vector<8x256xf32>
    %cst_22 = arith.constant dense<0.000000e+00> : vector<16x256xf32>
    %42 = tpu.matmul %40, %41, %cst_22 {dimension_numbers = #tpu.dot_dimension_numbers<[1], [0], [0], [1], [0, 0, 1, 1], [], []>} : vector<16x8xf32>, vector<8x256xf32>, vector<16x256xf32> -> vector<16x256xf32>
    %c0_23 = arith.constant 0 : index
    %43 = memref.load %arg16[%c0_23] : memref<1xf32, #tpu.memory_space<smem>>
    %44 = vector.broadcast %43 : f32 to vector<16x256xf32>
    %45 = arith.addf %42, %44 : vector<16x256xf32>
    %c0_24 = arith.constant 0 : index
    %c0_25 = arith.constant 0 : index
    %46 = vector.load %arg17[%c0_24, %c0_25] : memref<16x256xf32, #tpu.memory_space<vmem>>, vector<16x256xf32>
    tpu.vector_store %arg17[%c0_24, %c0_25], %45 {strides = array<i32>} : memref<16x256xf32, #tpu.memory_space<vmem>>, vector<16x256xf32>,
    return
  }
  func.func @transform_0(%arg0: i32, %arg1: i32) -> (i32, i32) {
    %c0_i32 = arith.constant 0 : i32
    %c0_i32_0 = arith.constant 0 : i32
    return %arg1, %c0_i32 : i32, i32
  }
  func.func @transform_1(%arg0: i32, %arg1: i32) -> (i32, i32) {
    %c0_i32 = arith.constant 0 : i32
    %c0_i32_0 = arith.constant 0 : i32
    return %c0_i32, %arg0 : i32, i32
  }
  func.func @transform_2(%arg0: i32, %arg1: i32) -> (i32, i32) {
    %c0_i32 = arith.constant 0 : i32
    %c0_i32_0 = arith.constant 0 : i32
    %c0_i32_1 = arith.constant 0 : i32
    return %c0_i32, %c0_i32_0 : i32, i32
  }
  func.func @transform_3(%arg0: i32, %arg1: i32) -> (i32, i32) {
    %c0_i32 = arith.constant 0 : i32
    %c0_i32_0 = arith.constant 0 : i32
    %c0_i32_1 = arith.constant 0 : i32
    return %c0_i32, %c0_i32_0 : i32, i32
  }
  func.func @transform_4(%arg0: i32, %arg1: i32) -> (i32, i32, i32) {
    %c0_i32 = arith.constant 0 : i32
    %c0_i32_0 = arith.constant 0 : i32
    %c0_i32_1 = arith.constant 0 : i32
    %c0_i32_2 = arith.constant 0 : i32
    return %c0_i32, %c0_i32_0, %c0_i32_1 : i32, i32, i32
  }
  func.func @transform_5(%arg0: i32, %arg1: i32) -> (i32, i32, i32) {
    %c0_i32 = arith.constant 0 : i32
    %c0_i32_0 = arith.constant 0 : i32
    %c0_i32_1 = arith.constant 0 : i32
    %c0_i32_2 = arith.constant 0 : i32
    return %c0_i32, %c0_i32_0, %c0_i32_1 : i32, i32, i32
  }
  func.func @transform_6(%arg0: i32, %arg1: i32) -> (i32, i32) {
    %c0_i32 = arith.constant 0 : i32
    %c0_i32_0 = arith.constant 0 : i32
    %c0_i32_1 = arith.constant 0 : i32
    return %c0_i32, %c0_i32_0 : i32, i32
  }
  func.func @transform_7(%arg0: i32, %arg1: i32) -> (i32, i32) {
    %c0_i32 = arith.constant 0 : i32
    %c0_i32_0 = arith.constant 0 : i32
    %c0_i32_1 = arith.constant 0 : i32
    return %c0_i32, %c0_i32_0 : i32, i32
  }
  func.func @transform_8(%arg0: i32, %arg1: i32) -> (i32, i32) {
    %c0_i32 = arith.constant 0 : i32
    %c0_i32_0 = arith.constant 0 : i32
    %c0_i32_1 = arith.constant 0 : i32
    return %c0_i32, %c0_i32_0 : i32, i32
  }
  func.func @transform_9(%arg0: i32, %arg1: i32) -> (i32, i32) {
    %c0_i32 = arith.constant 0 : i32
    %c0_i32_0 = arith.constant 0 : i32
    %c0_i32_1 = arith.constant 0 : i32
    return %c0_i32, %c0_i32_0 : i32, i32
  }
  func.func @transform_10(%arg0: i32, %arg1: i32) -> (i32, i32, i32) {
    %c0_i32 = arith.constant 0 : i32
    %c0_i32_0 = arith.constant 0 : i32
    %c0_i32_1 = arith.constant 0 : i32
    %c0_i32_2 = arith.constant 0 : i32
    return %c0_i32, %c0_i32_0, %c0_i32_1 : i32, i32, i32
  }
  func.func @transform_11(%arg0: i32, %arg1: i32) -> (i32, i32, i32) {
    %c0_i32 = arith.constant 0 : i32
    %c0_i32_0 = arith.constant 0 : i32
    %c0_i32_1 = arith.constant 0 : i32
    %c0_i32_2 = arith.constant 0 : i32
    return %c0_i32, %c0_i32_0, %c0_i32_1 : i32, i32, i32
  }
  func.func @transform_12(%arg0: i32, %arg1: i32) -> (i32, i32) {
    %c0_i32 = arith.constant 0 : i32
    %c0_i32_0 = arith.constant 0 : i32
    %c0_i32_1 = arith.constant 0 : i32
    return %c0_i32, %c0_i32_0 : i32, i32
  }
  func.func @transform_13(%arg0: i32, %arg1: i32) -> (i32, i32) {
    %c0_i32 = arith.constant 0 : i32
    %c0_i32_0 = arith.constant 0 : i32
    %c0_i32_1 = arith.constant 0 : i32
    return %c0_i32, %c0_i32_0 : i32, i32
  }
  func.func @transform_14(%arg0: i32, %arg1: i32) -> i32 {
    %c0_i32 = arith.constant 0 : i32
    %c0_i32_0 = arith.constant 0 : i32
    return %c0_i32 : i32
  }
  func.func @transform_15(%arg0: i32, %arg1: i32) -> (i32, i32) {
    %c0_i32 = arith.constant 0 : i32
    return %arg1, %arg0 : i32, i32
  }
}

</mosaic_0001>

<llo_original>
// kernel: deeponet_forward.1
$region0: #{deeponet_forward.1}
  #allocation0 [shape = 'u32[]', space=smem, size = 0x4, offset = 0x4, fixed_abs, tag = 'smem constant byte address 0x4 - core index']
  #allocation1 [shape = 'u32[144,128]{1,0:T(1,128)}', space=vmem, size = 0x12000, scoped, tag = 'internal scratch']
  #allocation2 [shape = 'f32[8,256]{1,0:T(8,128)}', space=vmem, size = 0x2000, scoped, tag = 'scratch operand']
  #allocation3 [shape = 'f32[1]{0:T(128)S(6)}', space=smem, size = 0x200, scoped, tag = 'scoped memory for deeponet_forward.1']
  %s0 = inlined_call_operand.vmem [shape: f32[16,16], index: 0, kind: input, shape index: {}]
  %s1 = inlined_call_operand.vmem [shape: f32[2,256], index: 1, kind: input, shape index: {}]
  %s2 = inlined_call_operand.vmem [shape: f32[16,32], index: 2, kind: input, shape index: {}]
  %s3 = inlined_call_operand.vmem [shape: f32[1,32], index: 3, kind: input, shape index: {}]
  %s4 = inlined_call_operand.vmem [shape: f32[3,32,32], index: 4, kind: input, shape index: {}]
  %s5 = inlined_call_operand.vmem [shape: f32[3,1,32], index: 5, kind: input, shape index: {}]
  %s6 = inlined_call_operand.vmem [shape: f32[32,8], index: 6, kind: input, shape index: {}]
  %s7 = inlined_call_operand.vmem [shape: f32[1,8], index: 7, kind: input, shape index: {}]
  %s8 = inlined_call_operand.vmem [shape: f32[32,2], index: 8, kind: input, shape index: {}]
  %s9 = inlined_call_operand.vmem [shape: f32[32,1], index: 9, kind: input, shape index: {}]
  %s10 = inlined_call_operand.vmem [shape: f32[3,32,32], index: 10, kind: input, shape index: {}]
  %s11 = inlined_call_operand.vmem [shape: f32[3,32,1], index: 11, kind: input, shape index: {}]
  %s12 = inlined_call_operand.vmem [shape: f32[8,32], index: 12, kind: input, shape index: {}]
  %s13 = inlined_call_operand.vmem [shape: f32[8,1], index: 13, kind: input, shape index: {}]
  %s14 = inlined_call_operand.<no memory space> [shape: f32[1], index: 14, kind: input, shape index: {}]
  %s15 = inlined_call_operand.vmem [shape: f32[16,256], index: 15, kind: output, shape index: {}]
  %s16 = sld [smem:[#allocation0]]
  $region74: #{deeponet_forward.1} parent=0
    _
  %s18 = ssub.s32 1, %s16
  %s19 = scalar_select 0, %s18, %s16
  %20 = sst [smem:[#allocation3]] %s14
  // Predicated region
  $region2: #{deeponet_forward.1} parent=0 // pred_check
    _
  $region3: #{deeponet_forward.1} parent=0 // pred_check_branch
    %22 = sbr.rel (0) target = $region5
  $region4: #{deeponet_forward.1} parent=0 // pred_region
    _
  $region5: #{deeponet_forward.1} parent=0 // pred_fallthru
    _
  // Predicated region
  $region6: #{deeponet_forward.1} parent=0 // pred_check
    _
  $region7: #{deeponet_forward.1} parent=0 // pred_check_branch
    %24 = sbr.rel (0) target = $region9
  $region8: #{deeponet_forward.1} parent=0 // pred_region
    _
  $region9: #{deeponet_forward.1} parent=0 // pred_fallthru
    _
  // Predicated region
  $region10: #{deeponet_forward.1} parent=0 // pred_check
    _
  $region11: #{deeponet_forward.1} parent=0 // pred_check_branch
    %26 = sbr.rel (0) target = $region13
  $region12: #{deeponet_forward.1} parent=0 // pred_region
    _
  $region13: #{deeponet_forward.1} parent=0 // pred_fallthru
    _
  // Predicated region
  $region14: #{deeponet_forward.1} parent=0 // pred_check
    _
  $region15: #{deeponet_forward.1} parent=0 // pred_check_branch
    %28 = sbr.rel (0) target = $region17
  $region16: #{deeponet_forward.1} parent=0 // pred_region
    _
  $region17: #{deeponet_forward.1} parent=0 // pred_fallthru
    _
  // Predicated region
  $region18: #{deeponet_forward.1} parent=0 // pred_check
    _
  $region19: #{deeponet_forward.1} parent=0 // pred_check_branch
    %30 = sbr.rel (0) target = $region21
  $region20: #{deeponet_forward.1} parent=0 // pred_region
    _
  $region21: #{deeponet_forward.1} parent=0 // pred_fallthru
    _
  // Predicated region
  $region22: #{deeponet_forward.1} parent=0 // pred_check
    _
  $region23: #{deeponet_forward.1} parent=0 // pred_check_branch
    %32 = sbr.rel (0) target = $region25
  $region24: #{deeponet_forward.1} parent=0 // pred_region
    _
  $region25: #{deeponet_forward.1} parent=0 // pred_fallthru
    _
  // Predicated region
  $region26: #{deeponet_forward.1} parent=0 // pred_check
    _
  $region27: #{deeponet_forward.1} parent=0 // pred_check_branch
    %34 = sbr.rel (0) target = $region29
  $region28: #{deeponet_forward.1} parent=0 // pred_region
    _
  $region29: #{deeponet_forward.1} parent=0 // pred_fallthru
    _
  // Predicated region
  $region30: #{deeponet_forward.1} parent=0 // pred_check
    _
  $region31: #{deeponet_forward.1} parent=0 // pred_check_branch
    %36 = sbr.rel (0) target = $region33
  $region32: #{deeponet_forward.1} parent=0 // pred_region
    _
  $region33: #{deeponet_forward.1} parent=0 // pred_fallthru
    _
  // Predicated region
  $region34: #{deeponet_forward.1} parent=0 // pred_check
    _
  $region35: #{deeponet_forward.1} parent=0 // pred_check_branch
    %38 = sbr.rel (0) target = $region37
  $region36: #{deeponet_forward.1} parent=0 // pred_region
    _
  $region37: #{deeponet_forward.1} parent=0 // pred_fallthru
    _
  // Predicated region
  $region38: #{deeponet_forward.1} parent=0 // pred_check
    _
  $region39: #{deeponet_forward.1} parent=0 // pred_check_branch
    %40 = sbr.rel (0) target = $region41
  $region40: #{deeponet_forward.1} parent=0 // pred_region
    _
  $region41: #{deeponet_forward.1} parent=0 // pred_fallthru
    _
  // Predicated region
  $region42: #{deeponet_forward.1} parent=0 // pred_check
    _
  $region43: #{deeponet_forward.1} parent=0 // pred_check_branch
    %42 = sbr.rel (0) target = $region45
  $region44: #{deeponet_forward.1} parent=0 // pred_region
    _
  $region45: #{deeponet_forward.1} parent=0 // pred_fallthru
    _
  // Predicated region
  $region46: #{deeponet_forward.1} parent=0 // pred_check
    _
  $region47: #{deeponet_forward.1} parent=0 // pred_check_branch
    %44 = sbr.rel (0) target = $region49
  $region48: #{deeponet_forward.1} parent=0 // pred_region
    _
  $region49: #{deeponet_forward.1} parent=0 // pred_fallthru
    _
  // Predicated region
  $region50: #{deeponet_forward.1} parent=0 // pred_check
    _
  $region51: #{deeponet_forward.1} parent=0 // pred_check_branch
    %46 = sbr.rel (0) target = $region53
  $region52: #{deeponet_forward.1} parent=0 // pred_region
    _
  $region53: #{deeponet_forward.1} parent=0 // pred_fallthru
    _
  // Predicated region
  $region54: #{deeponet_forward.1} parent=0 // pred_check
    _
  $region55: #{deeponet_forward.1} parent=0 // pred_check_branch
    %48 = sbr.rel (0) target = $region57
  $region56: #{deeponet_forward.1} parent=0 // pred_region
    _
  $region57: #{deeponet_forward.1} parent=0 // pred_fallthru
    _
  // Predicated region
  $region58: #{deeponet_forward.1} parent=0 // pred_check
    _
  $region59: #{deeponet_forward.1} parent=0 // pred_check_branch
    %50 = sbr.rel (0) target = $region61
  $region60: #{deeponet_forward.1} parent=0 // pred_region
    _
  $region61: #{deeponet_forward.1} parent=0 // pred_fallthru
    _
  %p51 = scmp.eq.s32.totalorder 0, 0
  // Predicated region
  $region62: #{deeponet_forward.1} parent=0 // pred_check
    %p52 = pneg %p51
  $region63: #{deeponet_forward.1} parent=0 // pred_check_branch
    %54 = sbr.rel (%p52) target = $region65
  $region64: #{deeponet_forward.1} parent=0 // pred_region
    %v55 = vld [vmem:[%s1] sm:$0xf]
    %v56 = vld [vmem:[%s8] sm:$0xff]
    %v57 = vld [vmem:[%s8 + $0x8] sm:$0xff]
    %v58 = vld [vmem:[%s8 + $0x10] sm:$0xff]
    %v59 = vld [vmem:[%s8 + $0x18] sm:$0xff]
    %v60 = vld [vmem:[%s9] sm:$0xff]
    %v61 = vld [vmem:[%s9 + $0x8] sm:$0xff]
    %v62 = vld [vmem:[%s9 + $0x10] sm:$0xff]
    %v63 = vld [vmem:[%s9 + $0x18] sm:$0xff]
    %v64 = vld [vmem:[%s10] sm:$0xff]
    %v65 = vld [vmem:[%s10 + $0x8] sm:$0xff]
    %v66 = vld [vmem:[%s10 + $0x10] sm:$0xff]
    %v67 = vld [vmem:[%s10 + $0x18] sm:$0xff]
    %v68 = vld [vmem:[%s10 + $0x20] sm:$0xff]
    %v69 = vld [vmem:[%s10 + $0x28] sm:$0xff]
    %v70 = vld [vmem:[%s10 + $0x30] sm:$0xff]
    %v71 = vld [vmem:[%s10 + $0x38] sm:$0xff]
    %v72 = vld [vmem:[%s10 + $0x40] sm:$0xff]
    %v73 = vld [vmem:[%s10 + $0x48] sm:$0xff]
    %v74 = vld [vmem:[%s10 + $0x50] sm:$0xff]
    %v75 = vld [vmem:[%s10 + $0x58] sm:$0xff]
    %v76 = vld [vmem:[%s11] sm:$0xff]
    %v77 = vld [vmem:[%s11 + $0x8] sm:$0xff]
    %v78 = vld [vmem:[%s11 + $0x10] sm:$0xff]
    %v79 = vld [vmem:[%s11 + $0x18] sm:$0xff]
    %v80 = vld [vmem:[%s11 + $0x20] sm:$0xff]
    %v81 = vld [vmem:[%s11 + $0x28] sm:$0xff]
    %v82 = vld [vmem:[%s11 + $0x30] sm:$0xff]
    %v83 = vld [vmem:[%s11 + $0x38] sm:$0xff]
    %v84 = vld [vmem:[%s11 + $0x40] sm:$0xff]
    %v85 = vld [vmem:[%s11 + $0x48] sm:$0xff]
    %v86 = vld [vmem:[%s11 + $0x50] sm:$0xff]
    %v87 = vld [vmem:[%s11 + $0x58] sm:$0xff]
    %v88 = vld [vmem:[%s12] sm:$0xff]
    %v89 = vld [vmem:[%s13] sm:$0xff]
    %91 = vset.pattern.permute.xlu0 0
    %92 = vperm.xlu0 %91, %v56
    %v93 = vpop.permute.xlu0 %92
    %96 = vset.pattern.permute.xlu0 0
    %97 = vperm.xlu0 %96, %v57
    %v98 = vpop.permute.xlu0 %97
    %101 = vset.pattern.permute.xlu0 0
    %102 = vperm.xlu0 %101, %v58
    %v103 = vpop.permute.xlu0 %102
    %106 = vset.pattern.permute.xlu0 0
    %107 = vperm.xlu0 %106, %v59
    %v108 = vpop.permute.xlu0 %107
    %v111 = vlaneseq
    %v112 = vshrl.u32 %v111, 7
    %v113 = vsub.s32 0, %v112
    %v114 = vrot.slane %v55, %v113
    %v115 = vlaneseq
    %v116 = vshrl.u32 %v115, 7
    %v117 = vsub.s32 2, %v116
    %v118 = vrot.slane %v55, %v117
    %v121 = vlaneseq
    %v122 = vshrl.u32 %v121, 7
    %v123 = vsub.s32 0, %v122
    %v124 = vrot.slane %v114, %v123
    %v125 = vlaneseq
    %v126 = vshrl.u32 %v125, 7
    %v127 = vsub.s32 0, %v126
    %v128 = vrot.slane %v118, %v127
    %v129 = vmul.f32 %v93, %v124
    %v130 = vmul.f32 %v93, %v128
    %v131 = vmul.f32 %v98, %v124
    %v132 = vmul.f32 %v98, %v128
    %v133 = vmul.f32 %v103, %v124
    %v134 = vmul.f32 %v103, %v128
    %v135 = vmul.f32 %v108, %v124
    %v136 = vmul.f32 %v108, %v128
    %137 = vset.pattern.permute.xlu0 1
    %138 = vperm.xlu0 %137, %v56
    %v139 = vpop.permute.xlu0 %138
    %141 = vset.pattern.permute.xlu0 1
    %142 = vperm.xlu0 %141, %v57
    %v143 = vpop.permute.xlu0 %142
    %145 = vset.pattern.permute.xlu0 1
    %146 = vperm.xlu0 %145, %v58
    %v147 = vpop.permute.xlu0 %146
    %149 = vset.pattern.permute.xlu0 1
    %150 = vperm.xlu0 %149, %v59
    %v151 = vpop.permute.xlu0 %150
    %v153 = vlaneseq
    %v154 = vshrl.u32 %v153, 7
    %v155 = vsub.s32 1, %v154
    %v156 = vrot.slane %v55, %v155
    %v157 = vlaneseq
    %v158 = vshrl.u32 %v157, 7
    %v159 = vsub.s32 3, %v158
    %v160 = vrot.slane %v55, %v159
    %v163 = vlaneseq
    %v164 = vshrl.u32 %v163, 7
    %v165 = vsub.s32 1, %v164
    %v166 = vrot.slane %v156, %v165
    %v167 = vlaneseq
    %v168 = vshrl.u32 %v167, 7
    %v169 = vsub.s32 1, %v168
    %v170 = vrot.slane %v160, %v169
    %v171 = vmul.f32 %v139, %v166
    %v172 = vmul.f32 %v139, %v170
    %v173 = vmul.f32 %v143, %v166
    %v174 = vmul.f32 %v143, %v170
    %v175 = vmul.f32 %v147, %v166
    %v176 = vmul.f32 %v147, %v170
    %v177 = vmul.f32 %v151, %v166
    %v178 = vmul.f32 %v151, %v170
    %v179 = vadd.f32 %v129, %v171
    %v180 = vadd.f32 %v130, %v172
    %v181 = vadd.f32 %v131, %v173
    %v182 = vadd.f32 %v132, %v174
    %v183 = vadd.f32 %v133, %v175
    %v184 = vadd.f32 %v134, %v176
    %v185 = vadd.f32 %v135, %v177
    %v186 = vadd.f32 %v136, %v178
    %188 = vset.pattern.permute.xlu0 0
    %189 = vperm.xlu0 %188, %v60
    %v190 = vpop.permute.xlu0 %189
    %193 = vset.pattern.permute.xlu0 0
    %194 = vperm.xlu0 %193, %v61
    %v195 = vpop.permute.xlu0 %194
    %198 = vset.pattern.permute.xlu0 0
    %199 = vperm.xlu0 %198, %v62
    %v200 = vpop.permute.xlu0 %199
    %203 = vset.pattern.permute.xlu0 0
    %204 = vperm.xlu0 %203, %v63
    %v205 = vpop.permute.xlu0 %204
    %v207 = vadd.f32 %v179, %v190
    %v208 = vadd.f32 %v180, %v190
    %v209 = vadd.f32 %v181, %v195
    %v210 = vadd.f32 %v182, %v195
    %v211 = vadd.f32 %v183, %v200
    %v212 = vadd.f32 %v184, %v200
    %v213 = vadd.f32 %v185, %v205
    %v214 = vadd.f32 %v186, %v205
    %v215 = vtanh.pop %v207
    %v216 = vtanh.pop %v208
    %v217 = vtanh.pop %v209
    %v218 = vtanh.pop %v210
    %v219 = vtanh.pop %v211
    %v220 = vtanh.pop %v212
    %v221 = vtanh.pop %v213
    %v222 = vtanh.pop %v214
    %224 = vset.pattern.permute.xlu0 0
    %225 = vperm.xlu0 %224, %v76
    %v226 = vpop.permute.xlu0 %225
    %229 = vset.pattern.permute.xlu0 0
    %230 = vperm.xlu0 %229, %v77
    %v231 = vpop.permute.xlu0 %230
    %234 = vset.pattern.permute.xlu0 0
    %235 = vperm.xlu0 %234, %v78
    %v236 = vpop.permute.xlu0 %235
    %239 = vset.pattern.permute.xlu0 0
    %240 = vperm.xlu0 %239, %v79
    %v241 = vpop.permute.xlu0 %240
    %vm243 = vcmask 261120
    %v245 = vsel %vm243, %v64, 0
    %v248 = vsel %vm243, %v65, 0
    %v251 = vsel %vm243, %v66, 0
    %v254 = vsel %vm243, %v67, 0
    %256 = vmatprep.subr.mxu0 %v216
    %257 = vmatpush1.msra.mxu0 %v215
    %258 = vmatprep.subr.mxu0 %v218
    %259 = vmatpush1.msra.mxu0 %v217
    %260 = vmatprep.subr.mxu0 %v220
    %261 = vmatpush1.msra.mxu0 %v219
    %262 = vmatprep.subr.mxu0 %v222
    %263 = vmatpush1.msra.mxu0 %v221
    %264 = vmatprep.subr.mxu0 0.0
    %265 = vmatpush1.msra.mxu0 0.0
    %266 = vmatprep.subr.mxu0 0.0
    %267 = vmatpush1.msra.mxu0 0.0
    %268 = vmatprep.subr.mxu0 0.0
    %269 = vmatpush1.msra.mxu0 0.0
    %270 = vmatprep.subr.mxu0 0.0
    %271 = vmatpush1.msra.mxu0 0.0
    %272 = vmatprep.subr.mxu0 0.0
    %273 = vmatpush1.msra.mxu0 0.0
    %274 = vmatprep.subr.mxu0 0.0
    %275 = vmatpush1.msra.mxu0 0.0
    %276 = vmatprep.subr.mxu0 0.0
    %277 = vmatpush1.msra.mxu0 0.0
    %278 = vmatprep.subr.mxu0 0.0
    %279 = vmatpush1.msra.mxu0 0.0
    %280 = vmatprep.subr.mxu0 0.0
    %281 = vmatpush1.msra.mxu0 0.0
    %282 = vmatprep.subr.mxu0 0.0
    %283 = vmatpush1.msra.mxu0 0.0
    %284 = vmatprep.subr.mxu0 0.0
    %285 = vmatpush1.msra.mxu0 0.0
    %286 = vmatprep.subr.mxu0 0.0
    %287 = vmatpush1.msra.mxu0 0.0
    %288 = vmatprep.subr.mxu0 0.0
    %289 = vmatpush1.msra.mxu0 0.0
    %290 = vmatprep.subr.mxu0 0.0
    %291 = vmatpush1.msra.mxu0 0.0
    %292 = vmatprep.subr.mxu0 0.0
    %293 = vmatpush1.msra.mxu0 0.0
    %294 = vmatprep.subr.mxu0 0.0
    %295 = vmatpush1.msra.mxu0 0.0
    %296 = vmatprep.subr.mxu0 0.0
    %297 = vmatpush1.msra.mxu0 0.0
    %298 = vmatprep.subr.mxu0 0.0
    %299 = vmatpush1.msra.mxu0 0.0
    %300 = vmatprep.subr.mxu0 0.0
    %301 = vmatpush1.msra.mxu0 0.0
    %302 = vmatprep.subr.mxu0 0.0
    %303 = vmatpush1.msra.mxu0 0.0
    %304 = vmatprep.subr.mxu0 0.0
    %305 = vmatpush1.msra.mxu0 0.0
    %306 = vmatprep.subr.mxu0 0.0
    %307 = vmatpush1.msra.mxu0 0.0
    %308 = vmatprep.subr.mxu0 0.0
    %309 = vmatpush1.msra.mxu0 0.0
    %310 = vmatprep.subr.mxu0 0.0
    %311 = vmatpush1.msra.mxu0 0.0
    %312 = vmatprep.subr.mxu0 0.0
    %313 = vmatpush1.msra.mxu0 0.0
    %314 = vmatprep.subr.mxu0 0.0
    %315 = vmatpush1.msra.mxu0 0.0
    %316 = vmatprep.subr.mxu0 0.0
    %317 = vmatpush1.msra.mxu0 0.0
    %318 = vmatprep.subr.mxu0 0.0
    %319 = vmatpush1.msra.mxu0 0.0
    %320 = vmatprep.mubr.f32.mxu0 0.0
    %321 = vmatmul.mubr.f32.gmra.mrb[0].mxu0 %v245
    %v322 = vpop.f32.mrb[0].mxu0
    %v323 = vadd.f32 %v226, %v322
    %v324 = vpop.f32.mrb[0].mxu0
    %v325 = vadd.f32 %v226, %v324
    %326 = vmatprep.mubr.f32.mxu0 0.0
    %327 = vmatmul.mubr.f32.gmra.mrb[0].mxu0 %v248
    %v328 = vpop.f32.mrb[0].mxu0
    %v329 = vadd.f32 %v231, %v328
    %v330 = vpop.f32.mrb[0].mxu0
    %v331 = vadd.f32 %v231, %v330
    %332 = vmatprep.mubr.f32.mxu0 0.0
    %333 = vmatmul.mubr.f32.gmra.mrb[0].mxu0 %v251
    %v334 = vpop.f32.mrb[0].mxu0
    %v335 = vadd.f32 %v236, %v334
    %v336 = vpop.f32.mrb[0].mxu0
    %v337 = vadd.f32 %v236, %v336
    %338 = vmatprep.mubr.f32.mxu0 0.0
    %339 = vmatmul.mubr.f32.gmra.mrb[0].mxu0 %v254
    %v340 = vpop.f32.mrb[0].mxu0
    %v341 = vadd.f32 %v241, %v340
    %v342 = vpop.f32.mrb[0].mxu0
    %v343 = vadd.f32 %v241, %v342
    %344 = vdwg.mxu0
    %v345 = vtanh.pop %v323
    %v346 = vtanh.pop %v325
    %v347 = vtanh.pop %v329
    %v348 = vtanh.pop %v331
    %v349 = vtanh.pop %v335
    %v350 = vtanh.pop %v337
    %v351 = vtanh.pop %v341
    %v352 = vtanh.pop %v343
    %354 = vset.pattern.permute.xlu0 0
    %355 = vperm.xlu0 %354, %v80
    %v356 = vpop.permute.xlu0 %355
    %359 = vset.pattern.permute.xlu0 0
    %360 = vperm.xlu0 %359, %v81
    %v361 = vpop.permute.xlu0 %360
    %364 = vset.pattern.permute.xlu0 0
    %365 = vperm.xlu0 %364, %v82
    %v366 = vpop.permute.xlu0 %365
    %369 = vset.pattern.permute.xlu0 0
    %370 = vperm.xlu0 %369, %v83
    %v371 = vpop.permute.xlu0 %370
    %v374 = vsel %vm243, %v68, 0
    %v377 = vsel %vm243, %v69, 0
    %v380 = vsel %vm243, %v70, 0
    %v383 = vsel %vm243, %v71, 0
    %385 = vmatprep.subr.mxu0 %v346
    %386 = vmatpush1.msra.mxu0 %v345
    %387 = vmatprep.subr.mxu0 %v348
    %388 = vmatpush1.msra.mxu0 %v347
    %389 = vmatprep.subr.mxu0 %v350
    %390 = vmatpush1.msra.mxu0 %v349
    %391 = vmatprep.subr.mxu0 %v352
    %392 = vmatpush1.msra.mxu0 %v351
    %393 = vmatprep.subr.mxu0 0.0
    %394 = vmatpush1.msra.mxu0 0.0
    %395 = vmatprep.subr.mxu0 0.0
    %396 = vmatpush1.msra.mxu0 0.0
    %397 = vmatprep.subr.mxu0 0.0
    %398 = vmatpush1.msra.mxu0 0.0
    %399 = vmatprep.subr.mxu0 0.0
    %400 = vmatpush1.msra.mxu0 0.0
    %401 = vmatprep.subr.mxu0 0.0
    %402 = vmatpush1.msra.mxu0 0.0
    %403 = vmatprep.subr.mxu0 0.0
    %404 = vmatpush1.msra.mxu0 0.0
    %405 = vmatprep.subr.mxu0 0.0
    %406 = vmatpush1.msra.mxu0 0.0
    %407 = vmatprep.subr.mxu0 0.0
    %408 = vmatpush1.msra.mxu0 0.0
    %409 = vmatprep.subr.mxu0 0.0
    %410 = vmatpush1.msra.mxu0 0.0
    %411 = vmatprep.subr.mxu0 0.0
    %412 = vmatpush1.msra.mxu0 0.0
    %413 = vmatprep.subr.mxu0 0.0
    %414 = vmatpush1.msra.mxu0 0.0
    %415 = vmatprep.subr.mxu0 0.0
    %416 = vmatpush1.msra.mxu0 0.0
    %417 = vmatprep.subr.mxu0 0.0
    %418 = vmatpush1.msra.mxu0 0.0
    %419 = vmatprep.subr.mxu0 0.0
    %420 = vmatpush1.msra.mxu0 0.0
    %421 = vmatprep.subr.mxu0 0.0
    %422 = vmatpush1.msra.mxu0 0.0
    %423 = vmatprep.subr.mxu0 0.0
    %424 = vmatpush1.msra.mxu0 0.0
    %425 = vmatprep.subr.mxu0 0.0
    %426 = vmatpush1.msra.mxu0 0.0
    %427 = vmatprep.subr.mxu0 0.0
    %428 = vmatpush1.msra.mxu0 0.0
    %429 = vmatprep.subr.mxu0 0.0
    %430 = vmatpush1.msra.mxu0 0.0
    %431 = vmatprep.subr.mxu0 0.0
    %432 = vmatpush1.msra.mxu0 0.0
    %433 = vmatprep.subr.mxu0 0.0
    %434 = vmatpush1.msra.mxu0 0.0
    %435 = vmatprep.subr.mxu0 0.0
    %436 = vmatpush1.msra.mxu0 0.0
    %437 = vmatprep.subr.mxu0 0.0
    %438 = vmatpush1.msra.mxu0 0.0
    %439 = vmatprep.subr.mxu0 0.0
    %440 = vmatpush1.msra.mxu0 0.0
    %441 = vmatprep.subr.mxu0 0.0
    %442 = vmatpush1.msra.mxu0 0.0
    %443 = vmatprep.subr.mxu0 0.0
    %444 = vmatpush1.msra.mxu0 0.0
    %445 = vmatprep.subr.mxu0 0.0
    %446 = vmatpush1.msra.mxu0 0.0
    %447 = vmatprep.subr.mxu0 0.0
    %448 = vmatpush1.msra.mxu0 0.0
    %449 = vmatprep.mubr.f32.mxu0 0.0
    %450 = vmatmul.mubr.f32.gmra.mrb[0].mxu0 %v374
    %v451 = vpop.f32.mrb[0].mxu0
    %v452 = vadd.f32 %v356, %v451
    %v453 = vpop.f32.mrb[0].mxu0
    %v454 = vadd.f32 %v356, %v453
    %455 = vmatprep.mubr.f32.mxu0 0.0
    %456 = vmatmul.mubr.f32.gmra.mrb[0].mxu0 %v377
    %v457 = vpop.f32.mrb[0].mxu0
    %v458 = vadd.f32 %v361, %v457
    %v459 = vpop.f32.mrb[0].mxu0
    %v460 = vadd.f32 %v361, %v459
    %461 = vmatprep.mubr.f32.mxu0 0.0
    %462 = vmatmul.mubr.f32.gmra.mrb[0].mxu0 %v380
    %v463 = vpop.f32.mrb[0].mxu0
    %v464 = vadd.f32 %v366, %v463
    %v465 = vpop.f32.mrb[0].mxu0
    %v466 = vadd.f32 %v366, %v465
    %467 = vmatprep.mubr.f32.mxu0 0.0
    %468 = vmatmul.mubr.f32.gmra.mrb[0].mxu0 %v383
    %v469 = vpop.f32.mrb[0].mxu0
    %v470 = vadd.f32 %v371, %v469
    %v471 = vpop.f32.mrb[0].mxu0
    %v472 = vadd.f32 %v371, %v471
    %473 = vdwg.mxu0
    %v474 = vtanh.pop %v452
    %v475 = vtanh.pop %v454
    %v476 = vtanh.pop %v458
    %v477 = vtanh.pop %v460
    %v478 = vtanh.pop %v464
    %v479 = vtanh.pop %v466
    %v480 = vtanh.pop %v470
    %v481 = vtanh.pop %v472
    %483 = vset.pattern.permute.xlu0 0
    %484 = vperm.xlu0 %483, %v84
    %v485 = vpop.permute.xlu0 %484
    %488 = vset.pattern.permute.xlu0 0
    %489 = vperm.xlu0 %488, %v85
    %v490 = vpop.permute.xlu0 %489
    %493 = vset.pattern.permute.xlu0 0
    %494 = vperm.xlu0 %493, %v86
    %v495 = vpop.permute.xlu0 %494
    %498 = vset.pattern.permute.xlu0 0
    %499 = vperm.xlu0 %498, %v87
    %v500 = vpop.permute.xlu0 %499
    %v503 = vsel %vm243, %v72, 0
    %v506 = vsel %vm243, %v73, 0
    %v509 = vsel %vm243, %v74, 0
    %v512 = vsel %vm243, %v75, 0
    %514 = vmatprep.subr.mxu0 %v475
    %515 = vmatpush1.msra.mxu0 %v474
    %516 = vmatprep.subr.mxu0 %v477
    %517 = vmatpush1.msra.mxu0 %v476
    %518 = vmatprep.subr.mxu0 %v479
    %519 = vmatpush1.msra.mxu0 %v478
    %520 = vmatprep.subr.mxu0 %v481
    %521 = vmatpush1.msra.mxu0 %v480
    %522 = vmatprep.subr.mxu0 0.0
    %523 = vmatpush1.msra.mxu0 0.0
    %524 = vmatprep.subr.mxu0 0.0
    %525 = vmatpush1.msra.mxu0 0.0
    %526 = vmatprep.subr.mxu0 0.0
    %527 = vmatpush1.msra.mxu0 0.0
    %528 = vmatprep.subr.mxu0 0.0
    %529 = vmatpush1.msra.mxu0 0.0
    %530 = vmatprep.subr.mxu0 0.0
    %531 = vmatpush1.msra.mxu0 0.0
    %532 = vmatprep.subr.mxu0 0.0
    %533 = vmatpush1.msra.mxu0 0.0
    %534 = vmatprep.subr.mxu0 0.0
    %535 = vmatpush1.msra.mxu0 0.0
    %536 = vmatprep.subr.mxu0 0.0
    %537 = vmatpush1.msra.mxu0 0.0
    %538 = vmatprep.subr.mxu0 0.0
    %539 = vmatpush1.msra.mxu0 0.0
    %540 = vmatprep.subr.mxu0 0.0
    %541 = vmatpush1.msra.mxu0 0.0
    %542 = vmatprep.subr.mxu0 0.0
    %543 = vmatpush1.msra.mxu0 0.0
    %544 = vmatprep.subr.mxu0 0.0
    %545 = vmatpush1.msra.mxu0 0.0
    %546 = vmatprep.subr.mxu0 0.0
    %547 = vmatpush1.msra.mxu0 0.0
    %548 = vmatprep.subr.mxu0 0.0
    %549 = vmatpush1.msra.mxu0 0.0
    %550 = vmatprep.subr.mxu0 0.0
    %551 = vmatpush1.msra.mxu0 0.0
    %552 = vmatprep.subr.mxu0 0.0
    %553 = vmatpush1.msra.mxu0 0.0
    %554 = vmatprep.subr.mxu0 0.0
    %555 = vmatpush1.msra.mxu0 0.0
    %556 = vmatprep.subr.mxu0 0.0
    %557 = vmatpush1.msra.mxu0 0.0
    %558 = vmatprep.subr.mxu0 0.0
    %559 = vmatpush1.msra.mxu0 0.0
    %560 = vmatprep.subr.mxu0 0.0
    %561 = vmatpush1.msra.mxu0 0.0
    %562 = vmatprep.subr.mxu0 0.0
    %563 = vmatpush1.msra.mxu0 0.0
    %564 = vmatprep.subr.mxu0 0.0
    %565 = vmatpush1.msra.mxu0 0.0
    %566 = vmatprep.subr.mxu0 0.0
    %567 = vmatpush1.msra.mxu0 0.0
    %568 = vmatprep.subr.mxu0 0.0
    %569 = vmatpush1.msra.mxu0 0.0
    %570 = vmatprep.subr.mxu0 0.0
    %571 = vmatpush1.msra.mxu0 0.0
    %572 = vmatprep.subr.mxu0 0.0
    %573 = vmatpush1.msra.mxu0 0.0
    %574 = vmatprep.subr.mxu0 0.0
    %575 = vmatpush1.msra.mxu0 0.0
    %576 = vmatprep.subr.mxu0 0.0
    %577 = vmatpush1.msra.mxu0 0.0
    %578 = vmatprep.mubr.f32.mxu0 0.0
    %579 = vmatmul.mubr.f32.gmra.mrb[0].mxu0 %v503
    %v580 = vpop.f32.mrb[0].mxu0
    %v581 = vadd.f32 %v485, %v580
    %v582 = vpop.f32.mrb[0].mxu0
    %v583 = vadd.f32 %v485, %v582
    %584 = vmatprep.mubr.f32.mxu0 0.0
    %585 = vmatmul.mubr.f32.gmra.mrb[0].mxu0 %v506
    %v586 = vpop.f32.mrb[0].mxu0
    %v587 = vadd.f32 %v490, %v586
    %v588 = vpop.f32.mrb[0].mxu0
    %v589 = vadd.f32 %v490, %v588
    %590 = vmatprep.mubr.f32.mxu0 0.0
    %591 = vmatmul.mubr.f32.gmra.mrb[0].mxu0 %v509
    %v592 = vpop.f32.mrb[0].mxu0
    %v593 = vadd.f32 %v495, %v592
    %v594 = vpop.f32.mrb[0].mxu0
    %v595 = vadd.f32 %v495, %v594
    %596 = vmatprep.mubr.f32.mxu0 0.0
    %597 = vmatmul.mubr.f32.gmra.mrb[0].mxu0 %v512
    %v598 = vpop.f32.mrb[0].mxu0
    %v599 = vadd.f32 %v500, %v598
    %v600 = vpop.f32.mrb[0].mxu0
    %v601 = vadd.f32 %v500, %v600
    %602 = vdwg.mxu0
    %v603 = vtanh.pop %v581
    %v604 = vtanh.pop %v583
    %v605 = vtanh.pop %v587
    %v606 = vtanh.pop %v589
    %v607 = vtanh.pop %v593
    %v608 = vtanh.pop %v595
    %v609 = vtanh.pop %v599
    %v610 = vtanh.pop %v601
    %612 = vset.pattern.permute.xlu0 0
    %613 = vperm.xlu0 %612, %v89
    %v614 = vpop.permute.xlu0 %613
    %v617 = vsel %vm243, %v88, 0
    %619 = vmatprep.subr.mxu0 %v604
    %620 = vmatpush1.msra.mxu0 %v603
    %621 = vmatprep.subr.mxu0 %v606
    %622 = vmatpush1.msra.mxu0 %v605
    %623 = vmatprep.subr.mxu0 %v608
    %624 = vmatpush1.msra.mxu0 %v607
    %625 = vmatprep.subr.mxu0 %v610
    %626 = vmatpush1.msra.mxu0 %v609
    %627 = vmatprep.subr.mxu0 0.0
    %628 = vmatpush1.msra.mxu0 0.0
    %629 = vmatprep.subr.mxu0 0.0
    %630 = vmatpush1.msra.mxu0 0.0
    %631 = vmatprep.subr.mxu0 0.0
    %632 = vmatpush1.msra.mxu0 0.0
    %633 = vmatprep.subr.mxu0 0.0
    %634 = vmatpush1.msra.mxu0 0.0
    %635 = vmatprep.subr.mxu0 0.0
    %636 = vmatpush1.msra.mxu0 0.0
    %637 = vmatprep.subr.mxu0 0.0
    %638 = vmatpush1.msra.mxu0 0.0
    %639 = vmatprep.subr.mxu0 0.0
    %640 = vmatpush1.msra.mxu0 0.0
    %641 = vmatprep.subr.mxu0 0.0
    %642 = vmatpush1.msra.mxu0 0.0
    %643 = vmatprep.subr.mxu0 0.0
    %644 = vmatpush1.msra.mxu0 0.0
    %645 = vmatprep.subr.mxu0 0.0
    %646 = vmatpush1.msra.mxu0 0.0
    %647 = vmatprep.subr.mxu0 0.0
    %648 = vmatpush1.msra.mxu0 0.0
    %649 = vmatprep.subr.mxu0 0.0
    %650 = vmatpush1.msra.mxu0 0.0
    %651 = vmatprep.subr.mxu0 0.0
    %652 = vmatpush1.msra.mxu0 0.0
    %653 = vmatprep.subr.mxu0 0.0
    %654 = vmatpush1.msra.mxu0 0.0
    %655 = vmatprep.subr.mxu0 0.0
    %656 = vmatpush1.msra.mxu0 0.0
    %657 = vmatprep.subr.mxu0 0.0
    %658 = vmatpush1.msra.mxu0 0.0
    %659 = vmatprep.subr.mxu0 0.0
    %660 = vmatpush1.msra.mxu0 0.0
    %661 = vmatprep.subr.mxu0 0.0
    %662 = vmatpush1.msra.mxu0 0.0
    %663 = vmatprep.subr.mxu0 0.0
    %664 = vmatpush1.msra.mxu0 0.0
    %665 = vmatprep.subr.mxu0 0.0
    %666 = vmatpush1.msra.mxu0 0.0
    %667 = vmatprep.subr.mxu0 0.0
    %668 = vmatpush1.msra.mxu0 0.0
    %669 = vmatprep.subr.mxu0 0.0
    %670 = vmatpush1.msra.mxu0 0.0
    %671 = vmatprep.subr.mxu0 0.0
    %672 = vmatpush1.msra.mxu0 0.0
    %673 = vmatprep.subr.mxu0 0.0
    %674 = vmatpush1.msra.mxu0 0.0
    %675 = vmatprep.subr.mxu0 0.0
    %676 = vmatpush1.msra.mxu0 0.0
    %677 = vmatprep.subr.mxu0 0.0
    %678 = vmatpush1.msra.mxu0 0.0
    %679 = vmatprep.subr.mxu0 0.0
    %680 = vmatpush1.msra.mxu0 0.0
    %681 = vmatprep.subr.mxu0 0.0
    %682 = vmatpush1.msra.mxu0 0.0
    %683 = vmatprep.mubr.f32.mxu0 0.0
    %684 = vmatmul.mubr.f32.gmra.mrb[0].mxu0 %v617
    %v685 = vpop.f32.mrb[0].mxu0
    %v686 = vadd.f32 %v614, %v685
    %v687 = vpop.f32.mrb[0].mxu0
    %v688 = vadd.f32 %v614, %v687
    %689 = vdwg.mxu0
    %v690 = vtanh.pop %v686
    %v691 = vtanh.pop %v688
    %692 = vst [vmem:[#allocation2] sm:$0xff] %v690
    %693 = vst [vmem:[#allocation2 + $0x8] sm:$0xff] %v691
  $region65: #{deeponet_forward.1} parent=0 // pred_fallthru
    _
  %v694 = vld [vmem:[%s0] sm:$0xff]
  %v695 = vld [vmem:[%s0 + $0x8] sm:$0xff]
  %v696 = vld [vmem:[%s2] sm:$0xff]
  %v697 = vld [vmem:[%s2 + $0x8] sm:$0xff]
  %v698 = vld [vmem:[%s3] sm:$0x1]
  %v699 = vld [vmem:[%s4] sm:$0xff]
  %v700 = vld [vmem:[%s4 + $0x8] sm:$0xff]
  %v701 = vld [vmem:[%s4 + $0x10] sm:$0xff]
  %v702 = vld [vmem:[%s4 + $0x18] sm:$0xff]
  %v703 = vld [vmem:[%s4 + $0x20] sm:$0xff]
  %v704 = vld [vmem:[%s4 + $0x28] sm:$0xff]
  %v705 = vld [vmem:[%s4 + $0x30] sm:$0xff]
  %v706 = vld [vmem:[%s4 + $0x38] sm:$0xff]
  %v707 = vld [vmem:[%s4 + $0x40] sm:$0xff]
  %v708 = vld [vmem:[%s4 + $0x48] sm:$0xff]
  %v709 = vld [vmem:[%s4 + $0x50] sm:$0xff]
  %v710 = vld [vmem:[%s4 + $0x58] sm:$0xff]
  %v711 = vld [vmem:[%s5] sm:$0x1]
  %v712 = vld [vmem:[%s5 + $0x1] sm:$0x1]
  %v713 = vld [vmem:[%s5 + $0x2] sm:$0x1]
  %v714 = vld [vmem:[%s6] sm:$0xff]
  %v715 = vld [vmem:[%s6 + $0x8] sm:$0xff]
  %v716 = vld [vmem:[%s6 + $0x10] sm:$0xff]
  %v717 = vld [vmem:[%s6 + $0x18] sm:$0xff]
  %v718 = vld [vmem:[%s7] sm:$0x1]
  %v720 = vlaneseq
  %v721 = vshrl.u32 %v720, 7
  %v722 = vsub.s32 0, %v721
  %v723 = vrot.slane %v698, %v722
  %vm725 = vcmask 130048
  %v727 = vsel %vm725, %v694, 0
  %v730 = vsel %vm725, %v695, 0
  %732 = vmatprep.subr.mxu0 0.0
  %733 = vmatpush1.msra.mxu0 %v696
  %734 = vmatprep.subr.mxu0 0.0
  %735 = vmatpush1.msra.mxu0 %v697
  %736 = vmatprep.subr.mxu0 0.0
  %737 = vmatpush1.msra.mxu0 0.0
  %738 = vmatprep.subr.mxu0 0.0
  %739 = vmatpush1.msra.mxu0 0.0
  %740 = vmatprep.subr.mxu0 0.0
  %741 = vmatpush1.msra.mxu0 0.0
  %742 = vmatprep.subr.mxu0 0.0
  %743 = vmatpush1.msra.mxu0 0.0
  %744 = vmatprep.subr.mxu0 0.0
  %745 = vmatpush1.msra.mxu0 0.0
  %746 = vmatprep.subr.mxu0 0.0
  %747 = vmatpush1.msra.mxu0 0.0
  %748 = vmatprep.subr.mxu0 0.0
  %749 = vmatpush1.msra.mxu0 0.0
  %750 = vmatprep.subr.mxu0 0.0
  %751 = vmatpush1.msra.mxu0 0.0
  %752 = vmatprep.subr.mxu0 0.0
  %753 = vmatpush1.msra.mxu0 0.0
  %754 = vmatprep.subr.mxu0 0.0
  %755 = vmatpush1.msra.mxu0 0.0
  %756 = vmatprep.subr.mxu0 0.0
  %757 = vmatpush1.msra.mxu0 0.0
  %758 = vmatprep.subr.mxu0 0.0
  %759 = vmatpush1.msra.mxu0 0.0
  %760 = vmatprep.subr.mxu0 0.0
  %761 = vmatpush1.msra.mxu0 0.0
  %762 = vmatprep.subr.mxu0 0.0
  %763 = vmatpush1.msra.mxu0 0.0
  %764 = vmatprep.subr.mxu0 0.0
  %765 = vmatpush1.msra.mxu0 0.0
  %766 = vmatprep.subr.mxu0 0.0
  %767 = vmatpush1.msra.mxu0 0.0
  %768 = vmatprep.subr.mxu0 0.0
  %769 = vmatpush1.msra.mxu0 0.0
  %770 = vmatprep.subr.mxu0 0.0
  %771 = vmatpush1.msra.mxu0 0.0
  %772 = vmatprep.subr.mxu0 0.0
  %773 = vmatpush1.msra.mxu0 0.0
  %774 = vmatprep.subr.mxu0 0.0
  %775 = vmatpush1.msra.mxu0 0.0
  %776 = vmatprep.subr.mxu0 0.0
  %777 = vmatpush1.msra.mxu0 0.0
  %778 = vmatprep.subr.mxu0 0.0
  %779 = vmatpush1.msra.mxu0 0.0
  %780 = vmatprep.subr.mxu0 0.0
  %781 = vmatpush1.msra.mxu0 0.0
  %782 = vmatprep.subr.mxu0 0.0
  %783 = vmatpush1.msra.mxu0 0.0
  %784 = vmatprep.subr.mxu0 0.0
  %785 = vmatpush1.msra.mxu0 0.0
  %786 = vmatprep.subr.mxu0 0.0
  %787 = vmatpush1.msra.mxu0 0.0
  %788 = vmatprep.subr.mxu0 0.0
  %789 = vmatpush1.msra.mxu0 0.0
  %790 = vmatprep.subr.mxu0 0.0
  %791 = vmatpush1.msra.mxu0 0.0
  %792 = vmatprep.subr.mxu0 0.0
  %793 = vmatpush1.msra.mxu0 0.0
  %794 = vmatprep.subr.mxu0 0.0
  %795 = vmatpush1.msra.mxu0 0.0
  %796 = vmatprep.mubr.f32.mxu0 0.0
  %797 = vmatmul.mubr.f32.gmra.mrb[0].mxu0 %v727
  %v798 = vpop.f32.mrb[0].mxu0
  %v799 = vadd.f32 %v723, %v798
  %v800 = vpop.f32.mrb[0].mxu0
  %801 = vmatprep.mubr.f32.mxu0 0.0
  %802 = vmatmul.mubr.f32.gmra.mrb[0].mxu0 %v730
  %v803 = vpop.f32.mrb[0].mxu0
  %v804 = vadd.f32 %v723, %v803
  %v805 = vpop.f32.mrb[0].mxu0
  %806 = vdwg.mxu0
  %v807 = vtanh.pop %v799
  %v808 = vtanh.pop %v804
  %v810 = vlaneseq
  %v811 = vshrl.u32 %v810, 7
  %v812 = vsub.s32 0, %v811
  %v813 = vrot.slane %v711, %v812
  %vm815 = vcmask 261120
  %v817 = vsel %vm815, %v807, 0
  %v820 = vsel %vm815, %v808, 0
  %822 = vmatprep.subr.mxu0 0.0
  %823 = vmatpush1.msra.mxu0 %v699
  %824 = vmatprep.subr.mxu0 0.0
  %825 = vmatpush1.msra.mxu0 %v700
  %826 = vmatprep.subr.mxu0 0.0
  %827 = vmatpush1.msra.mxu0 %v701
  %828 = vmatprep.subr.mxu0 0.0
  %829 = vmatpush1.msra.mxu0 %v702
  %830 = vmatprep.subr.mxu0 0.0
  %831 = vmatpush1.msra.mxu0 0.0
  %832 = vmatprep.subr.mxu0 0.0
  %833 = vmatpush1.msra.mxu0 0.0
  %834 = vmatprep.subr.mxu0 0.0
  %835 = vmatpush1.msra.mxu0 0.0
  %836 = vmatprep.subr.mxu0 0.0
  %837 = vmatpush1.msra.mxu0 0.0
  %838 = vmatprep.subr.mxu0 0.0
  %839 = vmatpush1.msra.mxu0 0.0
  %840 = vmatprep.subr.mxu0 0.0
  %841 = vmatpush1.msra.mxu0 0.0
  %842 = vmatprep.subr.mxu0 0.0
  %843 = vmatpush1.msra.mxu0 0.0
  %844 = vmatprep.subr.mxu0 0.0
  %845 = vmatpush1.msra.mxu0 0.0
  %846 = vmatprep.subr.mxu0 0.0
  %847 = vmatpush1.msra.mxu0 0.0
  %848 = vmatprep.subr.mxu0 0.0
  %849 = vmatpush1.msra.mxu0 0.0
  %850 = vmatprep.subr.mxu0 0.0
  %851 = vmatpush1.msra.mxu0 0.0
  %852 = vmatprep.subr.mxu0 0.0
  %853 = vmatpush1.msra.mxu0 0.0
  %854 = vmatprep.subr.mxu0 0.0
  %855 = vmatpush1.msra.mxu0 0.0
  %856 = vmatprep.subr.mxu0 0.0
  %857 = vmatpush1.msra.mxu0 0.0
  %858 = vmatprep.subr.mxu0 0.0
  %859 = vmatpush1.msra.mxu0 0.0
  %860 = vmatprep.subr.mxu0 0.0
  %861 = vmatpush1.msra.mxu0 0.0
  %862 = vmatprep.subr.mxu0 0.0
  %863 = vmatpush1.msra.mxu0 0.0
  %864 = vmatprep.subr.mxu0 0.0
  %865 = vmatpush1.msra.mxu0 0.0
  %866 = vmatprep.subr.mxu0 0.0
  %867 = vmatpush1.msra.mxu0 0.0
  %868 = vmatprep.subr.mxu0 0.0
  %869 = vmatpush1.msra.mxu0 0.0
  %870 = vmatprep.subr.mxu0 0.0
  %871 = vmatpush1.msra.mxu0 0.0
  %872 = vmatprep.subr.mxu0 0.0
  %873 = vmatpush1.msra.mxu0 0.0
  %874 = vmatprep.subr.mxu0 0.0
  %875 = vmatpush1.msra.mxu0 0.0
  %876 = vmatprep.subr.mxu0 0.0
  %877 = vmatpush1.msra.mxu0 0.0
  %878 = vmatprep.subr.mxu0 0.0
  %879 = vmatpush1.msra.mxu0 0.0
  %880 = vmatprep.subr.mxu0 0.0
  %881 = vmatpush1.msra.mxu0 0.0
  %882 = vmatprep.subr.mxu0 0.0
  %883 = vmatpush1.msra.mxu0 0.0
  %884 = vmatprep.subr.mxu0 0.0
  %885 = vmatpush1.msra.mxu0 0.0
  %886 = vmatprep.mubr.f32.mxu0 0.0
  %887 = vmatmul.mubr.f32.gmra.mrb[0].mxu0 %v817
  %v888 = vpop.f32.mrb[0].mxu0
  %v889 = vadd.f32 %v813, %v888
  %v890 = vpop.f32.mrb[0].mxu0
  %891 = vmatprep.mubr.f32.mxu0 0.0
  %892 = vmatmul.mubr.f32.gmra.mrb[0].mxu0 %v820
  %v893 = vpop.f32.mrb[0].mxu0
  %v894 = vadd.f32 %v813, %v893
  %v895 = vpop.f32.mrb[0].mxu0
  %896 = vdwg.mxu0
  %v897 = vtanh.pop %v889
  %v898 = vtanh.pop %v894
  %v900 = vlaneseq
  %v901 = vshrl.u32 %v900, 7
  %v902 = vsub.s32 0, %v901
  %v903 = vrot.slane %v712, %v902
  %v906 = vsel %vm815, %v897, 0
  %v909 = vsel %vm815, %v898, 0
  %911 = vmatprep.subr.mxu0 0.0
  %912 = vmatpush1.msra.mxu0 %v703
  %913 = vmatprep.subr.mxu0 0.0
  %914 = vmatpush1.msra.mxu0 %v704
  %915 = vmatprep.subr.mxu0 0.0
  %916 = vmatpush1.msra.mxu0 %v705
  %917 = vmatprep.subr.mxu0 0.0
  %918 = vmatpush1.msra.mxu0 %v706
  %919 = vmatprep.subr.mxu0 0.0
  %920 = vmatpush1.msra.mxu0 0.0
  %921 = vmatprep.subr.mxu0 0.0
  %922 = vmatpush1.msra.mxu0 0.0
  %923 = vmatprep.subr.mxu0 0.0
  %924 = vmatpush1.msra.mxu0 0.0
  %925 = vmatprep.subr.mxu0 0.0
  %926 = vmatpush1.msra.mxu0 0.0
  %927 = vmatprep.subr.mxu0 0.0
  %928 = vmatpush1.msra.mxu0 0.0
  %929 = vmatprep.subr.mxu0 0.0
  %930 = vmatpush1.msra.mxu0 0.0
  %931 = vmatprep.subr.mxu0 0.0
  %932 = vmatpush1.msra.mxu0 0.0
  %933 = vmatprep.subr.mxu0 0.0
  %934 = vmatpush1.msra.mxu0 0.0
  %935 = vmatprep.subr.mxu0 0.0
  %936 = vmatpush1.msra.mxu0 0.0
  %937 = vmatprep.subr.mxu0 0.0
  %938 = vmatpush1.msra.mxu0 0.0
  %939 = vmatprep.subr.mxu0 0.0
  %940 = vmatpush1.msra.mxu0 0.0
  %941 = vmatprep.subr.mxu0 0.0
  %942 = vmatpush1.msra.mxu0 0.0
  %943 = vmatprep.subr.mxu0 0.0
  %944 = vmatpush1.msra.mxu0 0.0
  %945 = vmatprep.subr.mxu0 0.0
  %946 = vmatpush1.msra.mxu0 0.0
  %947 = vmatprep.subr.mxu0 0.0
  %948 = vmatpush1.msra.mxu0 0.0
  %949 = vmatprep.subr.mxu0 0.0
  %950 = vmatpush1.msra.mxu0 0.0
  %951 = vmatprep.subr.mxu0 0.0
  %952 = vmatpush1.msra.mxu0 0.0
  %953 = vmatprep.subr.mxu0 0.0
  %954 = vmatpush1.msra.mxu0 0.0
  %955 = vmatprep.subr.mxu0 0.0
  %956 = vmatpush1.msra.mxu0 0.0
  %957 = vmatprep.subr.mxu0 0.0
  %958 = vmatpush1.msra.mxu0 0.0
  %959 = vmatprep.subr.mxu0 0.0
  %960 = vmatpush1.msra.mxu0 0.0
  %961 = vmatprep.subr.mxu0 0.0
  %962 = vmatpush1.msra.mxu0 0.0
  %963 = vmatprep.subr.mxu0 0.0
  %964 = vmatpush1.msra.mxu0 0.0
  %965 = vmatprep.subr.mxu0 0.0
  %966 = vmatpush1.msra.mxu0 0.0
  %967 = vmatprep.subr.mxu0 0.0
  %968 = vmatpush1.msra.mxu0 0.0
  %969 = vmatprep.subr.mxu0 0.0
  %970 = vmatpush1.msra.mxu0 0.0
  %971 = vmatprep.subr.mxu0 0.0
  %972 = vmatpush1.msra.mxu0 0.0
  %973 = vmatprep.subr.mxu0 0.0
  %974 = vmatpush1.msra.mxu0 0.0
  %975 = vmatprep.mubr.f32.mxu0 0.0
  %976 = vmatmul.mubr.f32.gmra.mrb[0].mxu0 %v906
  %v977 = vpop.f32.mrb[0].mxu0
  %v978 = vadd.f32 %v903, %v977
  %v979 = vpop.f32.mrb[0].mxu0
  %980 = vmatprep.mubr.f32.mxu0 0.0
  %981 = vmatmul.mubr.f32.gmra.mrb[0].mxu0 %v909
  %v982 = vpop.f32.mrb[0].mxu0
  %v983 = vadd.f32 %v903, %v982
  %v984 = vpop.f32.mrb[0].mxu0
  %985 = vdwg.mxu0
  %v986 = vtanh.pop %v978
  %v987 = vtanh.pop %v983
  %v989 = vlaneseq
  %v990 = vshrl.u32 %v989, 7
  %v991 = vsub.s32 0, %v990
  %v992 = vrot.slane %v713, %v991
  %v995 = vsel %vm815, %v986, 0
  %v998 = vsel %vm815, %v987, 0
  %1000 = vmatprep.subr.mxu0 0.0
  %1001 = vmatpush1.msra.mxu0 %v707
  %1002 = vmatprep.subr.mxu0 0.0
  %1003 = vmatpush1.msra.mxu0 %v708
  %1004 = vmatprep.subr.mxu0 0.0
  %1005 = vmatpush1.msra.mxu0 %v709
  %1006 = vmatprep.subr.mxu0 0.0
  %1007 = vmatpush1.msra.mxu0 %v710
  %1008 = vmatprep.subr.mxu0 0.0
  %1009 = vmatpush1.msra.mxu0 0.0
  %1010 = vmatprep.subr.mxu0 0.0
  %1011 = vmatpush1.msra.mxu0 0.0
  %1012 = vmatprep.subr.mxu0 0.0
  %1013 = vmatpush1.msra.mxu0 0.0
  %1014 = vmatprep.subr.mxu0 0.0
  %1015 = vmatpush1.msra.mxu0 0.0
  %1016 = vmatprep.subr.mxu0 0.0
  %1017 = vmatpush1.msra.mxu0 0.0
  %1018 = vmatprep.subr.mxu0 0.0
  %1019 = vmatpush1.msra.mxu0 0.0
  %1020 = vmatprep.subr.mxu0 0.0
  %1021 = vmatpush1.msra.mxu0 0.0
  %1022 = vmatprep.subr.mxu0 0.0
  %1023 = vmatpush1.msra.mxu0 0.0
  %1024 = vmatprep.subr.mxu0 0.0
  %1025 = vmatpush1.msra.mxu0 0.0
  %1026 = vmatprep.subr.mxu0 0.0
  %1027 = vmatpush1.msra.mxu0 0.0
  %1028 = vmatprep.subr.mxu0 0.0
  %1029 = vmatpush1.msra.mxu0 0.0
  %1030 = vmatprep.subr.mxu0 0.0
  %1031 = vmatpush1.msra.mxu0 0.0
  %1032 = vmatprep.subr.mxu0 0.0
  %1033 = vmatpush1.msra.mxu0 0.0
  %1034 = vmatprep.subr.mxu0 0.0
  %1035 = vmatpush1.msra.mxu0 0.0
  %1036 = vmatprep.subr.mxu0 0.0
  %1037 = vmatpush1.msra.mxu0 0.0
  %1038 = vmatprep.subr.mxu0 0.0
  %1039 = vmatpush1.msra.mxu0 0.0
  %1040 = vmatprep.subr.mxu0 0.0
  %1041 = vmatpush1.msra.mxu0 0.0
  %1042 = vmatprep.subr.mxu0 0.0
  %1043 = vmatpush1.msra.mxu0 0.0
  %1044 = vmatprep.subr.mxu0 0.0
  %1045 = vmatpush1.msra.mxu0 0.0
  %1046 = vmatprep.subr.mxu0 0.0
  %1047 = vmatpush1.msra.mxu0 0.0
  %1048 = vmatprep.subr.mxu0 0.0
  %1049 = vmatpush1.msra.mxu0 0.0
  %1050 = vmatprep.subr.mxu0 0.0
  %1051 = vmatpush1.msra.mxu0 0.0
  %1052 = vmatprep.subr.mxu0 0.0
  %1053 = vmatpush1.msra.mxu0 0.0
  %1054 = vmatprep.subr.mxu0 0.0
  %1055 = vmatpush1.msra.mxu0 0.0
  %1056 = vmatprep.subr.mxu0 0.0
  %1057 = vmatpush1.msra.mxu0 0.0
  %1058 = vmatprep.subr.mxu0 0.0
  %1059 = vmatpush1.msra.mxu0 0.0
  %1060 = vmatprep.subr.mxu0 0.0
  %1061 = vmatpush1.msra.mxu0 0.0
  %1062 = vmatprep.subr.mxu0 0.0
  %1063 = vmatpush1.msra.mxu0 0.0
  %1064 = vmatprep.mubr.f32.mxu0 0.0
  %1065 = vmatmul.mubr.f32.gmra.mrb[0].mxu0 %v995
  %v1066 = vpop.f32.mrb[0].mxu0
  %v1067 = vadd.f32 %v992, %v1066
  %v1068 = vpop.f32.mrb[0].mxu0
  %1069 = vmatprep.mubr.f32.mxu0 0.0
  %1070 = vmatmul.mubr.f32.gmra.mrb[0].mxu0 %v998
  %v1071 = vpop.f32.mrb[0].mxu0
  %v1072 = vadd.f32 %v992, %v1071
  %v1073 = vpop.f32.mrb[0].mxu0
  %1074 = vdwg.mxu0
  %v1075 = vtanh.pop %v1067
  %v1076 = vtanh.pop %v1072
  %v1078 = vlaneseq
  %v1079 = vshrl.u32 %v1078, 7
  %v1080 = vsub.s32 0, %v1079
  %v1081 = vrot.slane %v718, %v1080
  %v1084 = vsel %vm815, %v1075, 0
  %v1087 = vsel %vm815, %v1076, 0
  %1089 = vmatprep.subr.mxu0 0.0
  %1090 = vmatpush1.msra.mxu0 %v714
  %1091 = vmatprep.subr.mxu0 0.0
  %1092 = vmatpush1.msra.mxu0 %v715
  %1093 = vmatprep.subr.mxu0 0.0
  %1094 = vmatpush1.msra.mxu0 %v716
  %1095 = vmatprep.subr.mxu0 0.0
  %1096 = vmatpush1.msra.mxu0 %v717
  %1097 = vmatprep.subr.mxu0 0.0
  %1098 = vmatpush1.msra.mxu0 0.0
  %1099 = vmatprep.subr.mxu0 0.0
  %1100 = vmatpush1.msra.mxu0 0.0
  %1101 = vmatprep.subr.mxu0 0.0
  %1102 = vmatpush1.msra.mxu0 0.0
  %1103 = vmatprep.subr.mxu0 0.0
  %1104 = vmatpush1.msra.mxu0 0.0
  %1105 = vmatprep.subr.mxu0 0.0
  %1106 = vmatpush1.msra.mxu0 0.0
  %1107 = vmatprep.subr.mxu0 0.0
  %1108 = vmatpush1.msra.mxu0 0.0
  %1109 = vmatprep.subr.mxu0 0.0
  %1110 = vmatpush1.msra.mxu0 0.0
  %1111 = vmatprep.subr.mxu0 0.0
  %1112 = vmatpush1.msra.mxu0 0.0
  %1113 = vmatprep.subr.mxu0 0.0
  %1114 = vmatpush1.msra.mxu0 0.0
  %1115 = vmatprep.subr.mxu0 0.0
  %1116 = vmatpush1.msra.mxu0 0.0
  %1117 = vmatprep.subr.mxu0 0.0
  %1118 = vmatpush1.msra.mxu0 0.0
  %1119 = vmatprep.subr.mxu0 0.0
  %1120 = vmatpush1.msra.mxu0 0.0
  %1121 = vmatprep.subr.mxu0 0.0
  %1122 = vmatpush1.msra.mxu0 0.0
  %1123 = vmatprep.subr.mxu0 0.0
  %1124 = vmatpush1.msra.mxu0 0.0
  %1125 = vmatprep.subr.mxu0 0.0
  %1126 = vmatpush1.msra.mxu0 0.0
  %1127 = vmatprep.subr.mxu0 0.0
  %1128 = vmatpush1.msra.mxu0 0.0
  %1129 = vmatprep.subr.mxu0 0.0
  %1130 = vmatpush1.msra.mxu0 0.0
  %1131 = vmatprep.subr.mxu0 0.0
  %1132 = vmatpush1.msra.mxu0 0.0
  %1133 = vmatprep.subr.mxu0 0.0
  %1134 = vmatpush1.msra.mxu0 0.0
  %1135 = vmatprep.subr.mxu0 0.0
  %1136 = vmatpush1.msra.mxu0 0.0
  %1137 = vmatprep.subr.mxu0 0.0
  %1138 = vmatpush1.msra.mxu0 0.0
  %1139 = vmatprep.subr.mxu0 0.0
  %1140 = vmatpush1.msra.mxu0 0.0
  %1141 = vmatprep.subr.mxu0 0.0
  %1142 = vmatpush1.msra.mxu0 0.0
  %1143 = vmatprep.subr.mxu0 0.0
  %1144 = vmatpush1.msra.mxu0 0.0
  %1145 = vmatprep.subr.mxu0 0.0
  %1146 = vmatpush1.msra.mxu0 0.0
  %1147 = vmatprep.subr.mxu0 0.0
  %1148 = vmatpush1.msra.mxu0 0.0
  %1149 = vmatprep.subr.mxu0 0.0
  %1150 = vmatpush1.msra.mxu0 0.0
  %1151 = vmatprep.subr.mxu0 0.0
  %1152 = vmatpush1.msra.mxu0 0.0
  %1153 = vmatprep.mubr.f32.mxu0 0.0
  %1154 = vmatmul.mubr.f32.gmra.mrb[0].mxu0 %v1084
  %v1155 = vpop.f32.mrb[0].mxu0
  %v1156 = vadd.f32 %v1081, %v1155
  %v1157 = vpop.f32.mrb[0].mxu0
  %1158 = vmatprep.mubr.f32.mxu0 0.0
  %1159 = vmatmul.mubr.f32.gmra.mrb[0].mxu0 %v1087
  %v1160 = vpop.f32.mrb[0].mxu0
  %v1161 = vadd.f32 %v1081, %v1160
  %v1162 = vpop.f32.mrb[0].mxu0
  %1163 = vdwg.mxu0
  %v1164 = vld [vmem:[#allocation2] sm:$0xff]
  %v1165 = vld [vmem:[#allocation2 + $0x8] sm:$0xff]
  %s1166 = sld [smem:[#allocation3]]
  %v1167 = vstv %s1166
  %vm1168 = vcmask 64512
  %v1170 = vsel %vm1168, %v1156, 0
  %v1173 = vsel %vm1168, %v1161, 0
  %1175 = vmatprep.subr.mxu0 %v1165
  %1176 = vmatpush1.msra.mxu0 %v1164
  %1177 = vmatprep.subr.mxu0 0.0
  %1178 = vmatpush1.msra.mxu0 0.0
  %1179 = vmatprep.subr.mxu0 0.0
  %1180 = vmatpush1.msra.mxu0 0.0
  %1181 = vmatprep.subr.mxu0 0.0
  %1182 = vmatpush1.msra.mxu0 0.0
  %1183 = vmatprep.subr.mxu0 0.0
  %1184 = vmatpush1.msra.mxu0 0.0
  %1185 = vmatprep.subr.mxu0 0.0
  %1186 = vmatpush1.msra.mxu0 0.0
  %1187 = vmatprep.subr.mxu0 0.0
  %1188 = vmatpush1.msra.mxu0 0.0
  %1189 = vmatprep.subr.mxu0 0.0
  %1190 = vmatpush1.msra.mxu0 0.0
  %1191 = vmatprep.subr.mxu0 0.0
  %1192 = vmatpush1.msra.mxu0 0.0
  %1193 = vmatprep.subr.mxu0 0.0
  %1194 = vmatpush1.msra.mxu0 0.0
  %1195 = vmatprep.subr.mxu0 0.0
  %1196 = vmatpush1.msra.mxu0 0.0
  %1197 = vmatprep.subr.mxu0 0.0
  %1198 = vmatpush1.msra.mxu0 0.0
  %1199 = vmatprep.subr.mxu0 0.0
  %1200 = vmatpush1.msra.mxu0 0.0
  %1201 = vmatprep.subr.mxu0 0.0
  %1202 = vmatpush1.msra.mxu0 0.0
  %1203 = vmatprep.subr.mxu0 0.0
  %1204 = vmatpush1.msra.mxu0 0.0
  %1205 = vmatprep.subr.mxu0 0.0
  %1206 = vmatpush1.msra.mxu0 0.0
  %1207 = vmatprep.subr.mxu0 0.0
  %1208 = vmatpush1.msra.mxu0 0.0
  %1209 = vmatprep.subr.mxu0 0.0
  %1210 = vmatpush1.msra.mxu0 0.0
  %1211 = vmatprep.subr.mxu0 0.0
  %1212 = vmatpush1.msra.mxu0 0.0
  %1213 = vmatprep.subr.mxu0 0.0
  %1214 = vmatpush1.msra.mxu0 0.0
  %1215 = vmatprep.subr.mxu0 0.0
  %1216 = vmatpush1.msra.mxu0 0.0
  %1217 = vmatprep.subr.mxu0 0.0
  %1218 = vmatpush1.msra.mxu0 0.0
  %1219 = vmatprep.subr.mxu0 0.0
  %1220 = vmatpush1.msra.mxu0 0.0
  %1221 = vmatprep.subr.mxu0 0.0
  %1222 = vmatpush1.msra.mxu0 0.0
  %1223 = vmatprep.subr.mxu0 0.0
  %1224 = vmatpush1.msra.mxu0 0.0
  %1225 = vmatprep.subr.mxu0 0.0
  %1226 = vmatpush1.msra.mxu0 0.0
  %1227 = vmatprep.subr.mxu0 0.0
  %1228 = vmatpush1.msra.mxu0 0.0
  %1229 = vmatprep.subr.mxu0 0.0
  %1230 = vmatpush1.msra.mxu0 0.0
  %1231 = vmatprep.subr.mxu0 0.0
  %1232 = vmatpush1.msra.mxu0 0.0
  %1233 = vmatprep.subr.mxu0 0.0
  %1234 = vmatpush1.msra.mxu0 0.0
  %1235 = vmatprep.subr.mxu0 0.0
  %1236 = vmatpush1.msra.mxu0 0.0
  %1237 = vmatprep.subr.mxu0 0.0
  %1238 = vmatpush1.msra.mxu0 0.0
  %1239 = vmatprep.mubr.f32.mxu0 0.0
  %1240 = vmatmul.mubr.f32.gmra.mrb[0].mxu0 %v1170
  %v1241 = vpop.f32.mrb[0].mxu0
  %v1242 = vadd.f32 %v1167, %v1241
  %v1243 = vpop.f32.mrb[0].mxu0
  %v1244 = vadd.f32 %v1167, %v1243
  %1245 = vmatprep.mubr.f32.mxu0 0.0
  %1246 = vmatmul.mubr.f32.gmra.mrb[0].mxu0 %v1173
  %v1247 = vpop.f32.mrb[0].mxu0
  %v1248 = vadd.f32 %v1167, %v1247
  %v1249 = vpop.f32.mrb[0].mxu0
  %v1250 = vadd.f32 %v1167, %v1249
  %1251 = vdwg.mxu0
  %1252 = vst [vmem:[%s15] sm:$0xff] %v1242
  %1253 = vst [vmem:[%s15 + $0x8] sm:$0xff] %v1244
  %1254 = vst [vmem:[%s15 + $0x10] sm:$0xff] %v1248
  %1255 = vst [vmem:[%s15 + $0x18] sm:$0xff] %v1250
  // Predicated region
  $region66: #{deeponet_forward.1} parent=0 // pred_check
    _
  $region67: #{deeponet_forward.1} parent=0 // pred_check_branch
    %1257 = sbr.rel (0) target = $region69
  $region68: #{deeponet_forward.1} parent=0 // pred_region
    _
  $region69: #{deeponet_forward.1} parent=0 // pred_fallthru
    _
  // Predicated region
  $region70: #{deeponet_forward.1} parent=0 // pred_check
    _
  $region71: #{deeponet_forward.1} parent=0 // pred_check_branch
    %1259 = sbr.rel (0) target = $region73
  $region72: #{deeponet_forward.1} parent=0 // pred_region
    _
  $region73: #{deeponet_forward.1} parent=0 // pred_fallthru
    _

</llo_original>
